<compile_context>
chip_gen: v6e
topology: v6e:2x2x1
jax: 0.10.0
libtpu: 0.0.40
codegen_flags: <defaults>
</compile_context>

<pallas_src>
import functools

import jax
import jax.numpy as jnp
from jax.experimental import pallas as pl
from jax.experimental.pallas import tpu as pltpu


# ----------------------------------------------------------------------------
# Fused Pallas kernel: one MobileOne block (dw 3x3 -> SE? -> ReLU -> pw 1x1
# -> SE? -> ReLU) for one batch element.  All branches / BN affines have been
# folded into the effective weights (wdw/bdw, wpw/bpw) in the wrapper.
# ----------------------------------------------------------------------------
def _fused_block_kernel(ph_ref, wdw_ref, bdw_ref, wpw_ref, bpw_ref, *rest,
                        stride, ph_h, ho, wo, has_se):
    if has_se:
        (s1wr_ref, s1br_ref, s1we_ref, s1be_ref,
         s2wr_ref, s2br_ref, s2we_ref, s2be_ref, out_ref) = rest
    else:
        (out_ref,) = rest

    s = stride
    cin = wdw_ref.shape[-1]

    # ---- depthwise 3x3 (folded): 9 taps = static slices of the phase planes ----
    # phases layout: ph_ref[(py*s+px)*ph_h + r, q, :] == x_pad[s*r + py, s*q + px, :]
    y = None
    for dy in range(3):
        for dx in range(3):
            t = dy * 3 + dx
            r0 = ((dy % s) * s + (dx % s)) * ph_h + dy // s
            c0 = dx // s
            tap = ph_ref[r0:r0 + ho, c0:c0 + wo, :]                # (ho, wo, cin)
            term = tap * wdw_ref[t:t + 1, :]
            y = term if y is None else y + term
    y = y + bdw_ref[...]

    if has_se:
        pooled = jnp.sum(jnp.sum(y, axis=0), axis=0, keepdims=True) * (1.0 / (ho * wo))
        r = jnp.maximum(
            jnp.dot(pooled, s1wr_ref[...], preferred_element_type=jnp.float32)
            + s1br_ref[...], 0.0)
        e = jnp.dot(r, s1we_ref[...], preferred_element_type=jnp.float32) + s1be_ref[...]
        y = y * (1.0 / (1.0 + jnp.exp(-e)))                        # sigmoid gate

    y = jnp.maximum(y, 0.0)                                        # ReLU

    # ---- pointwise 1x1 (folded): bf16 MXU matmul, f32 accumulate ----------------
    xm = y.reshape(ho * wo, cin).astype(jnp.bfloat16)
    z = jnp.dot(xm, wpw_ref[...], preferred_element_type=jnp.float32) + bpw_ref[...]

    if has_se:
        pooled2 = jnp.sum(z, axis=0, keepdims=True) * (1.0 / (ho * wo))
        r2 = jnp.maximum(
            jnp.dot(pooled2, s2wr_ref[...], preferred_element_type=jnp.float32)
            + s2br_ref[...], 0.0)
        e2 = jnp.dot(r2, s2we_ref[...], preferred_element_type=jnp.float32) + s2be_ref[...]
        z = z * (1.0 / (1.0 + jnp.exp(-e2)))

    z = jnp.maximum(z, 0.0)                                        # ReLU
    out_ref[...] = z.reshape(ho, wo, -1).astype(out_ref.dtype)


# ----------------------------------------------------------------------------
# Wrapper: one pallas_call per fused MobileOne block, grid over batch.
# ----------------------------------------------------------------------------
def _full_spec(a):
    nd = a.ndim
    return pl.BlockSpec(a.shape, lambda *_: (0,) * nd)


def fused_block_forward(x, p):
    n, h, w, cin = x.shape
    s = p["stride"]
    ho = (h + 2 - 3) // s + 1
    wo = (w + 2 - 3) // s + 1
    ph_h = ho + 2 // s                 # rows / cols per stride-phase plane
    ph_w = wo + 2 // s

    # pad: top/left = 1 (as in the module); bottom/right so phases tile exactly
    xp = jnp.pad(x, ((0, 0), (1, s * ph_h - h - 1), (1, s * ph_w - w - 1), (0, 0)))
    # space-to-depth (no-op for stride 1): 1x HBM reorganisation instead of 9x im2col
    phases = jnp.transpose(xp.reshape(n, ph_h, s, ph_w, s, cin), (0, 2, 4, 1, 3, 5))
    phases = phases.reshape(n, s * s * ph_h, ph_w, cin)

    cout = p["pw_w"].shape[-1]
    has_se = p["se"]
    kernel = functools.partial(_fused_block_kernel, stride=s, ph_h=ph_h,
                               ho=ho, wo=wo, has_se=has_se)

    in_arrays = [phases, p["dw_w"], p["dw_b"], p["pw_w"], p["pw_b"]]
    in_specs = [pl.BlockSpec((None, s * s * ph_h, ph_w, cin), lambda i: (i, 0, 0, 0))]
    in_specs += [_full_spec(a) for a in in_arrays[1:]]
    if has_se:
        se_arrays = [p["se1_wr"], p["se1_br"], p["se1_we"], p["se1_be"],
                     p["se2_wr"], p["se2_br"], p["se2_we"], p["se2_be"]]
        in_arrays += se_arrays
        in_specs += [_full_spec(a) for a in se_arrays]

    return pl.pallas_call(
        kernel,
        out_shape=jax.ShapeDtypeStruct((n, ho, wo, cout), x.dtype),
        grid=(n,),
        in_specs=in_specs,
        out_specs=pl.BlockSpec((None, ho, wo, cout), lambda i: (i, 0, 0, 0)),
        compiler_params=pltpu.CompilerParams(dimension_semantics=("parallel",)),
    )(*in_arrays)


def mobileone_stage_forward(x, eff_blocks):
    for p in eff_blocks:
        x = fused_block_forward(x, p)
    return x


# ----------------------------------------------------------------------------
# Deterministic raw-parameter initialization (mirrors MobileOneStage.__init__).
# ----------------------------------------------------------------------------
def _bn_affine(key, c, eps=1e-5):
    k1, k2, k3, k4 = jax.random.split(key, 4)
    gamma = 1.0 + 0.1 * jax.random.normal(k1, (c,), jnp.float32)
    beta = 0.1 * jax.random.normal(k2, (c,), jnp.float32)
    mean = 0.1 * jax.random.normal(k3, (c,), jnp.float32)
    var = 1.0 + 0.1 * jax.random.uniform(k4, (c,), jnp.float32)
    scale = gamma * jax.lax.rsqrt(var + eps)
    return scale, beta - mean * scale


def _conv_bn(key, w_shape, c_out):
    kw, kbn = jax.random.split(key)
    w = 0.2 * jax.random.normal(kw, w_shape, jnp.float32)
    s, b = _bn_affine(kbn, c_out)
    return w, s, b


def _init_se(key, c, rd_ratio=0.0625):
    crd = max(1, int(c * rd_ratio))
    k1, k2, k3, k4 = jax.random.split(key, 4)
    return dict(
        se_wr=0.2 * jax.random.normal(k1, (c, crd), jnp.float32),
        se_br=0.1 * jax.random.normal(k2, (1, crd), jnp.float32),
        se_we=0.2 * jax.random.normal(k3, (crd, c), jnp.float32),
        se_be=0.1 * jax.random.normal(k4, (1, c), jnp.float32),
    )


def init_dw_params(key, c, stride, se, k_branches):
    keys = jax.random.split(key, k_branches + 3)
    ws, ss, bs = [], [], []
    for b in range(k_branches):
        w, s_, b_ = _conv_bn(keys[b], (3, 3, c), c)
        ws.append(w.reshape(9, c)); ss.append(s_); bs.append(b_)
    scale_w, scale_s, scale_b = _conv_bn(keys[k_branches], (c,), c)
    p = dict(K=k_branches,
             conv_w=jnp.stack(ws), conv_s=jnp.stack(ss), conv_b=jnp.stack(bs),
             scale_w=scale_w, scale_s=scale_s, scale_b=scale_b)
    if stride == 1:
        skip_s, skip_b = _bn_affine(keys[k_branches + 1], c)
        p.update(skip_s=skip_s, skip_b=skip_b)
    if se:
        p.update(_init_se(keys[k_branches + 2], c))
    return p


def init_pw_params(key, cin, cout, se, k_branches):
    keys = jax.random.split(key, k_branches + 2)
    ws, ss, bs = [], [], []
    for b in range(k_branches):
        w, s_, b_ = _conv_bn(keys[b], (cin, cout), cout)
        ws.append(w); ss.append(s_); bs.append(b_)
    has_skip = (cin == cout)
    p = dict(K=k_branches, has_skip=has_skip,
             conv_w=jnp.stack(ws), conv_s=jnp.stack(ss), conv_b=jnp.stack(bs))
    if has_skip:
        skip_s, skip_b = _bn_affine(keys[k_branches], cout)
        p.update(skip_s=skip_s, skip_b=skip_b)
    if se:
        p.update(_init_se(keys[k_branches + 1], cout))
    return p


def init_mobileone_stage(key, in_channels, out_channels, num_blocks, num_se_blocks,
                         num_conv_branches):
    assert num_se_blocks <= num_blocks
    strides = [2] + [1] * (num_blocks - 1)
    blocks = []
    c_in = in_channels
    for ix, stride in enumerate(strides):
        se = ix >= num_blocks - num_se_blocks
        key, k1, k2 = jax.random.split(key, 3)
        blocks.append(dict(
            stride=stride, se=se,
            dw=init_dw_params(k1, c_in, stride, se, num_conv_branches),
            pw=init_pw_params(k2, c_in, out_channels, se, num_conv_branches)))
        c_in = out_channels
    return blocks


# ----------------------------------------------------------------------------
# Branch / BN folding (exact: eval-mode BN is a fixed affine, branch sum is linear).
# ----------------------------------------------------------------------------
def fold_block_params(blk):
    dw, pw, stride = blk["dw"], blk["pw"], blk["stride"]

    # depthwise: one effective 9-tap weight (9, C) + bias (1, C)
    w_dw = jnp.einsum("ktc,kc->tc", dw["conv_w"], dw["conv_s"])
    b_dw = jnp.sum(dw["conv_b"], axis=0)
    w_dw = w_dw.at[4].add(dw["scale_w"] * dw["scale_s"])          # 1x1 "scale" branch
    b_dw = b_dw + dw["scale_b"]
    if stride == 1:                                               # BN-only skip branch
        w_dw = w_dw.at[4].add(dw["skip_s"])
        b_dw = b_dw + dw["skip_b"]

    # pointwise: one effective (Cin, Cout) weight + bias (1, Cout)
    w_pw = jnp.einsum("kio,ko->io", pw["conv_w"], pw["conv_s"])
    b_pw = jnp.sum(pw["conv_b"], axis=0)
    if pw["has_skip"]:
        w_pw = w_pw + jnp.diag(pw["skip_s"])
        b_pw = b_pw + pw["skip_b"]

    eff = dict(stride=stride, se=blk["se"],
               dw_w=w_dw, dw_b=b_dw[None, :],
               pw_w=w_pw.astype(jnp.bfloat16), pw_b=b_pw[None, :])
    if blk["se"]:
        eff.update(se1_wr=dw["se_wr"], se1_br=dw["se_br"],
                   se1_we=dw["se_we"], se1_be=dw["se_be"],
                   se2_wr=pw["se_wr"], se2_br=pw["se_br"],
                   se2_we=pw["se_we"], se2_be=pw["se_be"])
    return eff


# ----------------------------------------------------------------------------
# Pure-JAX reference (un-folded, per-branch) for numerical sanity check.
# ----------------------------------------------------------------------------
def _ref_se(y, sp):
    pooled = jnp.mean(y, axis=(1, 2))
    r = jnp.maximum(pooled @ sp["se_wr"] + sp["se_br"], 0.0)
    g = jax.nn.sigmoid(r @ sp["se_we"] + sp["se_be"])
    return y * g[:, None, None, :]


def _ref_dw(x, blk):
    dw, s = blk["dw"], blk["stride"]
    c = x.shape[-1]
    out = 0.0
    for b in range(dw["K"]):
        w = dw["conv_w"][b].reshape(3, 3, 1, c)
        y = jax.lax.conv_general_dilated(
            x, w, (s, s), ((1, 1), (1, 1)),
            dimension_numbers=("NHWC", "HWIO", "NHWC"),
            feature_group_count=c, precision=jax.lax.Precision.HIGHEST)
        out = out + y * dw["conv_s"][b] + dw["conv_b"][b]
    xc = x[:, ::s, ::s, :]
    out = out + xc * (dw["scale_w"] * dw["scale_s"]) + dw["scale_b"]
    if s == 1:
        out = out + xc * dw["skip_s"] + dw["skip_b"]
    if blk["se"]:
        out = _ref_se(out, dw)
    return jnp.maximum(out, 0.0)


def _ref_pw(x, blk):
    pw = blk["pw"]
    out = 0.0
    for b in range(pw["K"]):
        y = jnp.einsum("nhwc,cd->nhwd", x, pw["conv_w"][b],
                       precision=jax.lax.Precision.HIGHEST)
        out = out + y * pw["conv_s"][b] + pw["conv_b"][b]
    if pw["has_skip"]:
        out = out + x * pw["skip_s"] + pw["skip_b"]
    if blk["se"]:
        out = _ref_se(out, pw)
    return jnp.maximum(out, 0.0)


def mobileone_stage_reference(x, blocks):
    for blk in blocks:
        x = _ref_pw(_ref_dw(x, blk), blk)
    return x


# ----------------------------------------------------------------------------
if __name__ == "__main__":
    key = jax.random.PRNGKey(0)
    kx, kp = jax.random.split(key)

    # Small config; in_channels=16 so SE reduce channels int(C*0.0625) >= 1.
    N, H, W = 2, 16, 16
    in_channels, out_channels = 16, 32
    num_blocks, num_se_blocks, num_conv_branches = 2, 1, 2

    # layout: NHWC (equivalent PyTorch NCHW input would be (2, 16, 16, 16))
    x = jax.random.normal(kx, (N, H, W, in_channels), jnp.float32)
    blocks = init_mobileone_stage(kp, in_channels, out_channels, num_blocks,
                                  num_se_blocks, num_conv_branches)
    eff_blocks = [fold_block_params(b) for b in blocks]

    forward = jax.jit(lambda xx: mobileone_stage_forward(xx, eff_blocks))
    y = jax.block_until_ready(forward(x))

    assert y.shape == (N, H // 2, W // 2, out_channels), y.shape

    y_ref = mobileone_stage_reference(x, blocks)
    max_err = float(jnp.max(jnp.abs(y - y_ref)))
    if not bool(jnp.allclose(y, y_ref, atol=3e-2, rtol=3e-2)):
        raise AssertionError(f"Pallas output mismatch vs reference, max abs err={max_err}")

    print("KERNEL_OK")
</pallas_src>

<mosaic_0001>
module attributes {stable_mosaic.version = 11 : i64} {
  func.func @_fused_block_kernel(%arg0: i32, %arg1: memref<1x36x9x16xf32, #tpu.memory_space<vmem>>, %arg2: memref<9x16xf32, #tpu.memory_space<vmem>>, %arg3: memref<1x16xf32, #tpu.memory_space<vmem>>, %arg4: memref<16x32xbf16, #tpu.memory_space<vmem>>, %arg5: memref<1x32xf32, #tpu.memory_space<vmem>>, %arg6: memref<1x8x8x32xf32, #tpu.memory_space<vmem>>) attributes {dimension_semantics = [#tpu.dimension_semantics<parallel>], iteration_bounds = array<i64: 2>, scalar_prefetch = 0 : i64, scratch_operands = 0 : i64, tpu.core_type = #tpu.core_type<tc>, window_params = [{transform_indices = @transform_0, window_bounds = array<i64: 1, 36, 9, 16>}, {pipeline_mode = #tpu.pipeline_mode<synchronous>, transform_indices = @transform_1, window_bounds = array<i64: 9, 16>}, {pipeline_mode = #tpu.pipeline_mode<synchronous>, transform_indices = @transform_2, window_bounds = array<i64: 1, 16>}, {pipeline_mode = #tpu.pipeline_mode<synchronous>, transform_indices = @transform_3, window_bounds = array<i64: 16, 32>}, {pipeline_mode = #tpu.pipeline_mode<synchronous>, transform_indices = @transform_4, window_bounds = array<i64: 1, 32>}, {transform_indices = @transform_5, window_bounds = array<i64: 1, 8, 8, 32>}]} {
    %c0 = arith.constant 0 : index
    %c0_0 = arith.constant 0 : index
    %c0_1 = arith.constant 0 : index
    %c0_2 = arith.constant 0 : index
    %0 = vector.load %arg1[%c0, %c0_0, %c0_1, %c0_2] : memref<1x36x9x16xf32, #tpu.memory_space<vmem>>, vector<1x8x8x16xf32>
    %1 = vector.shape_cast %0 : vector<1x8x8x16xf32> to vector<8x8x16xf32>
    %c0_3 = arith.constant 0 : index
    %c0_4 = arith.constant 0 : index
    %2 = vector.load %arg2[%c0_3, %c0_4] : memref<9x16xf32, #tpu.memory_space<vmem>>, vector<1x16xf32>
    %3 = vector.shape_cast %2 : vector<1x16xf32> to vector<1x1x16xf32>
    %4 = vector.broadcast %3 : vector<1x1x16xf32> to vector<8x8x16xf32>
    %5 = arith.mulf %1, %4 : vector<8x8x16xf32>
    %c0_5 = arith.constant 0 : index
    %c9 = arith.constant 9 : index
    %c0_6 = arith.constant 0 : index
    %c0_7 = arith.constant 0 : index
    %6 = vector.load %arg1[%c0_5, %c9, %c0_6, %c0_7] : memref<1x36x9x16xf32, #tpu.memory_space<vmem>>, vector<1x8x8x16xf32>
    %7 = vector.shape_cast %6 : vector<1x8x8x16xf32> to vector<8x8x16xf32>
    %c1 = arith.constant 1 : index
    %c0_8 = arith.constant 0 : index
    %8 = vector.load %arg2[%c1, %c0_8] : memref<9x16xf32, #tpu.memory_space<vmem>>, vector<1x16xf32>
    %9 = vector.shape_cast %8 : vector<1x16xf32> to vector<1x1x16xf32>
    %10 = vector.broadcast %9 : vector<1x1x16xf32> to vector<8x8x16xf32>
    %11 = arith.mulf %7, %10 : vector<8x8x16xf32>
    %12 = arith.addf %5, %11 : vector<8x8x16xf32>
    %c0_9 = arith.constant 0 : index
    %c0_10 = arith.constant 0 : index
    %c1_11 = arith.constant 1 : index
    %c0_12 = arith.constant 0 : index
    %13 = vector.load %arg1[%c0_9, %c0_10, %c1_11, %c0_12] : memref<1x36x9x16xf32, #tpu.memory_space<vmem>>, vector<1x8x8x16xf32>
    %14 = vector.shape_cast %13 : vector<1x8x8x16xf32> to vector<8x8x16xf32>
    %c2 = arith.constant 2 : index
    %c0_13 = arith.constant 0 : index
    %15 = vector.load %arg2[%c2, %c0_13] : memref<9x16xf32, #tpu.memory_space<vmem>>, vector<1x16xf32>
    %16 = vector.shape_cast %15 : vector<1x16xf32> to vector<1x1x16xf32>
    %17 = vector.broadcast %16 : vector<1x1x16xf32> to vector<8x8x16xf32>
    %18 = arith.mulf %14, %17 : vector<8x8x16xf32>
    %19 = arith.addf %12, %18 : vector<8x8x16xf32>
    %c0_14 = arith.constant 0 : index
    %c18 = arith.constant 18 : index
    %c0_15 = arith.constant 0 : index
    %c0_16 = arith.constant 0 : index
    %20 = vector.load %arg1[%c0_14, %c18, %c0_15, %c0_16] : memref<1x36x9x16xf32, #tpu.memory_space<vmem>>, vector<1x8x8x16xf32>
    %21 = vector.shape_cast %20 : vector<1x8x8x16xf32> to vector<8x8x16xf32>
    %c3 = arith.constant 3 : index
    %c0_17 = arith.constant 0 : index
    %22 = vector.load %arg2[%c3, %c0_17] : memref<9x16xf32, #tpu.memory_space<vmem>>, vector<1x16xf32>
    %23 = vector.shape_cast %22 : vector<1x16xf32> to vector<1x1x16xf32>
    %24 = vector.broadcast %23 : vector<1x1x16xf32> to vector<8x8x16xf32>
    %25 = arith.mulf %21, %24 : vector<8x8x16xf32>
    %26 = arith.addf %19, %25 : vector<8x8x16xf32>
    %c0_18 = arith.constant 0 : index
    %c27 = arith.constant 27 : index
    %c0_19 = arith.constant 0 : index
    %c0_20 = arith.constant 0 : index
    %27 = vector.load %arg1[%c0_18, %c27, %c0_19, %c0_20] : memref<1x36x9x16xf32, #tpu.memory_space<vmem>>, vector<1x8x8x16xf32>
    %28 = vector.shape_cast %27 : vector<1x8x8x16xf32> to vector<8x8x16xf32>
    %c4 = arith.constant 4 : index
    %c0_21 = arith.constant 0 : index
    %29 = vector.load %arg2[%c4, %c0_21] : memref<9x16xf32, #tpu.memory_space<vmem>>, vector<1x16xf32>
    %30 = vector.shape_cast %29 : vector<1x16xf32> to vector<1x1x16xf32>
    %31 = vector.broadcast %30 : vector<1x1x16xf32> to vector<8x8x16xf32>
    %32 = arith.mulf %28, %31 : vector<8x8x16xf32>
    %33 = arith.addf %26, %32 : vector<8x8x16xf32>
    %c0_22 = arith.constant 0 : index
    %c18_23 = arith.constant 18 : index
    %c1_24 = arith.constant 1 : index
    %c0_25 = arith.constant 0 : index
    %34 = vector.load %arg1[%c0_22, %c18_23, %c1_24, %c0_25] : memref<1x36x9x16xf32, #tpu.memory_space<vmem>>, vector<1x8x8x16xf32>
    %35 = vector.shape_cast %34 : vector<1x8x8x16xf32> to vector<8x8x16xf32>
    %c5 = arith.constant 5 : index
    %c0_26 = arith.constant 0 : index
    %36 = vector.load %arg2[%c5, %c0_26] : memref<9x16xf32, #tpu.memory_space<vmem>>, vector<1x16xf32>
    %37 = vector.shape_cast %36 : vector<1x16xf32> to vector<1x1x16xf32>
    %38 = vector.broadcast %37 : vector<1x1x16xf32> to vector<8x8x16xf32>
    %39 = arith.mulf %35, %38 : vector<8x8x16xf32>
    %40 = arith.addf %33, %39 : vector<8x8x16xf32>
    %c0_27 = arith.constant 0 : index
    %c1_28 = arith.constant 1 : index
    %c0_29 = arith.constant 0 : index
    %c0_30 = arith.constant 0 : index
    %41 = vector.load %arg1[%c0_27, %c1_28, %c0_29, %c0_30] : memref<1x36x9x16xf32, #tpu.memory_space<vmem>>, vector<1x8x8x16xf32>
    %42 = vector.shape_cast %41 : vector<1x8x8x16xf32> to vector<8x8x16xf32>
    %c6 = arith.constant 6 : index
    %c0_31 = arith.constant 0 : index
    %43 = vector.load %arg2[%c6, %c0_31] : memref<9x16xf32, #tpu.memory_space<vmem>>, vector<1x16xf32>
    %44 = vector.shape_cast %43 : vector<1x16xf32> to vector<1x1x16xf32>
    %45 = vector.broadcast %44 : vector<1x1x16xf32> to vector<8x8x16xf32>
    %46 = arith.mulf %42, %45 : vector<8x8x16xf32>
    %47 = arith.addf %40, %46 : vector<8x8x16xf32>
    %c0_32 = arith.constant 0 : index
    %c10 = arith.constant 10 : index
    %c0_33 = arith.constant 0 : index
    %c0_34 = arith.constant 0 : index
    %48 = vector.load %arg1[%c0_32, %c10, %c0_33, %c0_34] : memref<1x36x9x16xf32, #tpu.memory_space<vmem>>, vector<1x8x8x16xf32>
    %49 = vector.shape_cast %48 : vector<1x8x8x16xf32> to vector<8x8x16xf32>
    %c7 = arith.constant 7 : index
    %c0_35 = arith.constant 0 : index
    %50 = vector.load %arg2[%c7, %c0_35] : memref<9x16xf32, #tpu.memory_space<vmem>>, vector<1x16xf32>
    %51 = vector.shape_cast %50 : vector<1x16xf32> to vector<1x1x16xf32>
    %52 = vector.broadcast %51 : vector<1x1x16xf32> to vector<8x8x16xf32>
    %53 = arith.mulf %49, %52 : vector<8x8x16xf32>
    %54 = arith.addf %47, %53 : vector<8x8x16xf32>
    %c0_36 = arith.constant 0 : index
    %c1_37 = arith.constant 1 : index
    %c1_38 = arith.constant 1 : index
    %c0_39 = arith.constant 0 : index
    %55 = vector.load %arg1[%c0_36, %c1_37, %c1_38, %c0_39] : memref<1x36x9x16xf32, #tpu.memory_space<vmem>>, vector<1x8x8x16xf32>
    %56 = vector.shape_cast %55 : vector<1x8x8x16xf32> to vector<8x8x16xf32>
    %c8 = arith.constant 8 : index
    %c0_40 = arith.constant 0 : index
    %57 = vector.load %arg2[%c8, %c0_40] : memref<9x16xf32, #tpu.memory_space<vmem>>, vector<1x16xf32>
    %58 = vector.shape_cast %57 : vector<1x16xf32> to vector<1x1x16xf32>
    %59 = vector.broadcast %58 : vector<1x1x16xf32> to vector<8x8x16xf32>
    %60 = arith.mulf %56, %59 : vector<8x8x16xf32>
    %61 = arith.addf %54, %60 : vector<8x8x16xf32>
    %c0_41 = arith.constant 0 : index
    %c0_42 = arith.constant 0 : index
    %62 = vector.load %arg3[%c0_41, %c0_42] : memref<1x16xf32, #tpu.memory_space<vmem>>, vector<1x16xf32>
    %63 = vector.shape_cast %62 : vector<1x16xf32> to vector<1x1x16xf32>
    %64 = vector.broadcast %63 : vector<1x1x16xf32> to vector<8x8x16xf32>
    %65 = arith.addf %61, %64 : vector<8x8x16xf32>
    %cst = arith.constant 0.000000e+00 : f32
    %66 = vector.broadcast %cst : f32 to vector<8x8x16xf32>
    %67 = arith.maximumf %65, %66 : vector<8x8x16xf32>
    %68 = vector.shape_cast %67 : vector<8x8x16xf32> to vector<64x16xf32>
    %69 = arith.truncf %68 : vector<64x16xf32> to vector<64x16xbf16>
    %c0_43 = arith.constant 0 : index
    %c0_44 = arith.constant 0 : index
    %70 = vector.load %arg4[%c0_43, %c0_44] : memref<16x32xbf16, #tpu.memory_space<vmem>>, vector<16x32xbf16>
    %cst_45 = arith.constant dense<0.000000e+00> : vector<64x32xf32>
    %71 = tpu.matmul %69, %70, %cst_45 {dimension_numbers = #tpu.dot_dimension_numbers<[1], [0], [0], [1], [0, 0, 1, 1], [], []>} : vector<64x16xbf16>, vector<16x32xbf16>, vector<64x32xf32> -> vector<64x32xf32>
    %c0_46 = arith.constant 0 : index
    %c0_47 = arith.constant 0 : index
    %72 = vector.load %arg5[%c0_46, %c0_47] : memref<1x32xf32, #tpu.memory_space<vmem>>, vector<1x32xf32>
    %73 = vector.broadcast %72 : vector<1x32xf32> to vector<64x32xf32>
    %74 = arith.addf %71, %73 : vector<64x32xf32>
    %cst_48 = arith.constant 0.000000e+00 : f32
    %75 = vector.broadcast %cst_48 : f32 to vector<64x32xf32>
    %76 = arith.maximumf %74, %75 : vector<64x32xf32>
    %77 = vector.shape_cast %76 : vector<64x32xf32> to vector<8x8x32xf32>
    %c0_49 = arith.constant 0 : index
    %c0_50 = arith.constant 0 : index
    %c0_51 = arith.constant 0 : index
    %c0_52 = arith.constant 0 : index
    %78 = vector.load %arg6[%c0_49, %c0_50, %c0_51, %c0_52] : memref<1x8x8x32xf32, #tpu.memory_space<vmem>>, vector<1x8x8x32xf32>
    %79 = vector.shape_cast %78 : vector<1x8x8x32xf32> to vector<8x8x32xf32>
    %80 = vector.shape_cast %77 : vector<8x8x32xf32> to vector<1x8x8x32xf32>
    tpu.vector_store %arg6[%c0_49, %c0_50, %c0_51, %c0_52], %80 {strides = array<i32>} : memref<1x8x8x32xf32, #tpu.memory_space<vmem>>, vector<1x8x8x32xf32>,
    return
  }
  func.func @transform_0(%arg0: i32) -> (i32, i32, i32, i32) {
    %c0_i32 = arith.constant 0 : i32
    %c0_i32_0 = arith.constant 0 : i32
    %c0_i32_1 = arith.constant 0 : i32
    %c0_i32_2 = arith.constant 0 : i32
    return %arg0, %c0_i32, %c0_i32_0, %c0_i32_1 : i32, i32, i32, i32
  }
  func.func @transform_1(%arg0: i32) -> (i32, i32) {
    %c0_i32 = arith.constant 0 : i32
    %c0_i32_0 = arith.constant 0 : i32
    %c0_i32_1 = arith.constant 0 : i32
    return %c0_i32, %c0_i32_0 : i32, i32
  }
  func.func @transform_2(%arg0: i32) -> (i32, i32) {
    %c0_i32 = arith.constant 0 : i32
    %c0_i32_0 = arith.constant 0 : i32
    %c0_i32_1 = arith.constant 0 : i32
    return %c0_i32, %c0_i32_0 : i32, i32
  }
  func.func @transform_3(%arg0: i32) -> (i32, i32) {
    %c0_i32 = arith.constant 0 : i32
    %c0_i32_0 = arith.constant 0 : i32
    %c0_i32_1 = arith.constant 0 : i32
    return %c0_i32, %c0_i32_0 : i32, i32
  }
  func.func @transform_4(%arg0: i32) -> (i32, i32) {
    %c0_i32 = arith.constant 0 : i32
    %c0_i32_0 = arith.constant 0 : i32
    %c0_i32_1 = arith.constant 0 : i32
    return %c0_i32, %c0_i32_0 : i32, i32
  }
  func.func @transform_5(%arg0: i32) -> (i32, i32, i32, i32) {
    %c0_i32 = arith.constant 0 : i32
    %c0_i32_0 = arith.constant 0 : i32
    %c0_i32_1 = arith.constant 0 : i32
    %c0_i32_2 = arith.constant 0 : i32
    return %arg0, %c0_i32, %c0_i32_0, %c0_i32_1 : i32, i32, i32, i32
  }
}

module attributes {stable_mosaic.version = 11 : i64} {
  func.func @_fused_block_kernel(%arg0: i32, %arg1: memref<1x10x10x32xf32, #tpu.memory_space<vmem>>, %arg2: memref<9x32xf32, #tpu.memory_space<vmem>>, %arg3: memref<1x32xf32, #tpu.memory_space<vmem>>, %arg4: memref<32x32xbf16, #tpu.memory_space<vmem>>, %arg5: memref<1x32xf32, #tpu.memory_space<vmem>>, %arg6: memref<32x2xf32, #tpu.memory_space<vmem>>, %arg7: memref<1x2xf32, #tpu.memory_space<vmem>>, %arg8: memref<2x32xf32, #tpu.memory_space<vmem>>, %arg9: memref<1x32xf32, #tpu.memory_space<vmem>>, %arg10: memref<32x2xf32, #tpu.memory_space<vmem>>, %arg11: memref<1x2xf32, #tpu.memory_space<vmem>>, %arg12: memref<2x32xf32, #tpu.memory_space<vmem>>, %arg13: memref<1x32xf32, #tpu.memory_space<vmem>>, %arg14: memref<1x8x8x32xf32, #tpu.memory_space<vmem>>) attributes {dimension_semantics = [#tpu.dimension_semantics<parallel>], iteration_bounds = array<i64: 2>, scalar_prefetch = 0 : i64, scratch_operands = 0 : i64, tpu.core_type = #tpu.core_type<tc>, window_params = [{transform_indices = @transform_0, window_bounds = array<i64: 1, 10, 10, 32>}, {pipeline_mode = #tpu.pipeline_mode<synchronous>, transform_indices = @transform_1, window_bounds = array<i64: 9, 32>}, {pipeline_mode = #tpu.pipeline_mode<synchronous>, transform_indices = @transform_2, window_bounds = array<i64: 1, 32>}, {pipeline_mode = #tpu.pipeline_mode<synchronous>, transform_indices = @transform_3, window_bounds = array<i64: 32, 32>}, {pipeline_mode = #tpu.pipeline_mode<synchronous>, transform_indices = @transform_4, window_bounds = array<i64: 1, 32>}, {pipeline_mode = #tpu.pipeline_mode<synchronous>, transform_indices = @transform_5, window_bounds = array<i64: 32, 2>}, {pipeline_mode = #tpu.pipeline_mode<synchronous>, transform_indices = @transform_6, window_bounds = array<i64: 1, 2>}, {pipeline_mode = #tpu.pipeline_mode<synchronous>, transform_indices = @transform_7, window_bounds = array<i64: 2, 32>}, {pipeline_mode = #tpu.pipeline_mode<synchronous>, transform_indices = @transform_8, window_bounds = array<i64: 1, 32>}, {pipeline_mode = #tpu.pipeline_mode<synchronous>, transform_indices = @transform_9, window_bounds = array<i64: 32, 2>}, {pipeline_mode = #tpu.pipeline_mode<synchronous>, transform_indices = @transform_10, window_bounds = array<i64: 1, 2>}, {pipeline_mode = #tpu.pipeline_mode<synchronous>, transform_indices = @transform_11, window_bounds = array<i64: 2, 32>}, {pipeline_mode = #tpu.pipeline_mode<synchronous>, transform_indices = @transform_12, window_bounds = array<i64: 1, 32>}, {transform_indices = @transform_13, window_bounds = array<i64: 1, 8, 8, 32>}]} {
    %c0 = arith.constant 0 : index
    %c0_0 = arith.constant 0 : index
    %c0_1 = arith.constant 0 : index
    %c0_2 = arith.constant 0 : index
    %0 = vector.load %arg1[%c0, %c0_0, %c0_1, %c0_2] : memref<1x10x10x32xf32, #tpu.memory_space<vmem>>, vector<1x8x8x32xf32>
    %1 = vector.shape_cast %0 : vector<1x8x8x32xf32> to vector<8x8x32xf32>
    %c0_3 = arith.constant 0 : index
    %c0_4 = arith.constant 0 : index
    %2 = vector.load %arg2[%c0_3, %c0_4] : memref<9x32xf32, #tpu.memory_space<vmem>>, vector<1x32xf32>
    %3 = vector.shape_cast %2 : vector<1x32xf32> to vector<1x1x32xf32>
    %4 = vector.broadcast %3 : vector<1x1x32xf32> to vector<8x8x32xf32>
    %5 = arith.mulf %1, %4 : vector<8x8x32xf32>
    %c0_5 = arith.constant 0 : index
    %c0_6 = arith.constant 0 : index
    %c1 = arith.constant 1 : index
    %c0_7 = arith.constant 0 : index
    %6 = vector.load %arg1[%c0_5, %c0_6, %c1, %c0_7] : memref<1x10x10x32xf32, #tpu.memory_space<vmem>>, vector<1x8x8x32xf32>
    %7 = vector.shape_cast %6 : vector<1x8x8x32xf32> to vector<8x8x32xf32>
    %c1_8 = arith.constant 1 : index
    %c0_9 = arith.constant 0 : index
    %8 = vector.load %arg2[%c1_8, %c0_9] : memref<9x32xf32, #tpu.memory_space<vmem>>, vector<1x32xf32>
    %9 = vector.shape_cast %8 : vector<1x32xf32> to vector<1x1x32xf32>
    %10 = vector.broadcast %9 : vector<1x1x32xf32> to vector<8x8x32xf32>
    %11 = arith.mulf %7, %10 : vector<8x8x32xf32>
    %12 = arith.addf %5, %11 : vector<8x8x32xf32>
    %c0_10 = arith.constant 0 : index
    %c0_11 = arith.constant 0 : index
    %c2 = arith.constant 2 : index
    %c0_12 = arith.constant 0 : index
    %13 = vector.load %arg1[%c0_10, %c0_11, %c2, %c0_12] : memref<1x10x10x32xf32, #tpu.memory_space<vmem>>, vector<1x8x8x32xf32>
    %14 = vector.shape_cast %13 : vector<1x8x8x32xf32> to vector<8x8x32xf32>
    %c2_13 = arith.constant 2 : index
    %c0_14 = arith.constant 0 : index
    %15 = vector.load %arg2[%c2_13, %c0_14] : memref<9x32xf32, #tpu.memory_space<vmem>>, vector<1x32xf32>
    %16 = vector.shape_cast %15 : vector<1x32xf32> to vector<1x1x32xf32>
    %17 = vector.broadcast %16 : vector<1x1x32xf32> to vector<8x8x32xf32>
    %18 = arith.mulf %14, %17 : vector<8x8x32xf32>
    %19 = arith.addf %12, %18 : vector<8x8x32xf32>
    %c0_15 = arith.constant 0 : index
    %c1_16 = arith.constant 1 : index
    %c0_17 = arith.constant 0 : index
    %c0_18 = arith.constant 0 : index
    %20 = vector.load %arg1[%c0_15, %c1_16, %c0_17, %c0_18] : memref<1x10x10x32xf32, #tpu.memory_space<vmem>>, vector<1x8x8x32xf32>
    %21 = vector.shape_cast %20 : vector<1x8x8x32xf32> to vector<8x8x32xf32>
    %c3 = arith.constant 3 : index
    %c0_19 = arith.constant 0 : index
    %22 = vector.load %arg2[%c3, %c0_19] : memref<9x32xf32, #tpu.memory_space<vmem>>, vector<1x32xf32>
    %23 = vector.shape_cast %22 : vector<1x32xf32> to vector<1x1x32xf32>
    %24 = vector.broadcast %23 : vector<1x1x32xf32> to vector<8x8x32xf32>
    %25 = arith.mulf %21, %24 : vector<8x8x32xf32>
    %26 = arith.addf %19, %25 : vector<8x8x32xf32>
    %c0_20 = arith.constant 0 : index
    %c1_21 = arith.constant 1 : index
    %c1_22 = arith.constant 1 : index
    %c0_23 = arith.constant 0 : index
    %27 = vector.load %arg1[%c0_20, %c1_21, %c1_22, %c0_23] : memref<1x10x10x32xf32, #tpu.memory_space<vmem>>, vector<1x8x8x32xf32>
    %28 = vector.shape_cast %27 : vector<1x8x8x32xf32> to vector<8x8x32xf32>
    %c4 = arith.constant 4 : index
    %c0_24 = arith.constant 0 : index
    %29 = vector.load %arg2[%c4, %c0_24] : memref<9x32xf32, #tpu.memory_space<vmem>>, vector<1x32xf32>
    %30 = vector.shape_cast %29 : vector<1x32xf32> to vector<1x1x32xf32>
    %31 = vector.broadcast %30 : vector<1x1x32xf32> to vector<8x8x32xf32>
    %32 = arith.mulf %28, %31 : vector<8x8x32xf32>
    %33 = arith.addf %26, %32 : vector<8x8x32xf32>
    %c0_25 = arith.constant 0 : index
    %c1_26 = arith.constant 1 : index
    %c2_27 = arith.constant 2 : index
    %c0_28 = arith.constant 0 : index
    %34 = vector.load %arg1[%c0_25, %c1_26, %c2_27, %c0_28] : memref<1x10x10x32xf32, #tpu.memory_space<vmem>>, vector<1x8x8x32xf32>
    %35 = vector.shape_cast %34 : vector<1x8x8x32xf32> to vector<8x8x32xf32>
    %c5 = arith.constant 5 : index
    %c0_29 = arith.constant 0 : index
    %36 = vector.load %arg2[%c5, %c0_29] : memref<9x32xf32, #tpu.memory_space<vmem>>, vector<1x32xf32>
    %37 = vector.shape_cast %36 : vector<1x32xf32> to vector<1x1x32xf32>
    %38 = vector.broadcast %37 : vector<1x1x32xf32> to vector<8x8x32xf32>
    %39 = arith.mulf %35, %38 : vector<8x8x32xf32>
    %40 = arith.addf %33, %39 : vector<8x8x32xf32>
    %c0_30 = arith.constant 0 : index
    %c2_31 = arith.constant 2 : index
    %c0_32 = arith.constant 0 : index
    %c0_33 = arith.constant 0 : index
    %41 = vector.load %arg1[%c0_30, %c2_31, %c0_32, %c0_33] : memref<1x10x10x32xf32, #tpu.memory_space<vmem>>, vector<1x8x8x32xf32>
    %42 = vector.shape_cast %41 : vector<1x8x8x32xf32> to vector<8x8x32xf32>
    %c6 = arith.constant 6 : index
    %c0_34 = arith.constant 0 : index
    %43 = vector.load %arg2[%c6, %c0_34] : memref<9x32xf32, #tpu.memory_space<vmem>>, vector<1x32xf32>
    %44 = vector.shape_cast %43 : vector<1x32xf32> to vector<1x1x32xf32>
    %45 = vector.broadcast %44 : vector<1x1x32xf32> to vector<8x8x32xf32>
    %46 = arith.mulf %42, %45 : vector<8x8x32xf32>
    %47 = arith.addf %40, %46 : vector<8x8x32xf32>
    %c0_35 = arith.constant 0 : index
    %c2_36 = arith.constant 2 : index
    %c1_37 = arith.constant 1 : index
    %c0_38 = arith.constant 0 : index
    %48 = vector.load %arg1[%c0_35, %c2_36, %c1_37, %c0_38] : memref<1x10x10x32xf32, #tpu.memory_space<vmem>>, vector<1x8x8x32xf32>
    %49 = vector.shape_cast %48 : vector<1x8x8x32xf32> to vector<8x8x32xf32>
    %c7 = arith.constant 7 : index
    %c0_39 = arith.constant 0 : index
    %50 = vector.load %arg2[%c7, %c0_39] : memref<9x32xf32, #tpu.memory_space<vmem>>, vector<1x32xf32>
    %51 = vector.shape_cast %50 : vector<1x32xf32> to vector<1x1x32xf32>
    %52 = vector.broadcast %51 : vector<1x1x32xf32> to vector<8x8x32xf32>
    %53 = arith.mulf %49, %52 : vector<8x8x32xf32>
    %54 = arith.addf %47, %53 : vector<8x8x32xf32>
    %c0_40 = arith.constant 0 : index
    %c2_41 = arith.constant 2 : index
    %c2_42 = arith.constant 2 : index
    %c0_43 = arith.constant 0 : index
    %55 = vector.load %arg1[%c0_40, %c2_41, %c2_42, %c0_43] : memref<1x10x10x32xf32, #tpu.memory_space<vmem>>, vector<1x8x8x32xf32>
    %56 = vector.shape_cast %55 : vector<1x8x8x32xf32> to vector<8x8x32xf32>
    %c8 = arith.constant 8 : index
    %c0_44 = arith.constant 0 : index
    %57 = vector.load %arg2[%c8, %c0_44] : memref<9x32xf32, #tpu.memory_space<vmem>>, vector<1x32xf32>
    %58 = vector.shape_cast %57 : vector<1x32xf32> to vector<1x1x32xf32>
    %59 = vector.broadcast %58 : vector<1x1x32xf32> to vector<8x8x32xf32>
    %60 = arith.mulf %56, %59 : vector<8x8x32xf32>
    %61 = arith.addf %54, %60 : vector<8x8x32xf32>
    %c0_45 = arith.constant 0 : index
    %c0_46 = arith.constant 0 : index
    %62 = vector.load %arg3[%c0_45, %c0_46] : memref<1x32xf32, #tpu.memory_space<vmem>>, vector<1x32xf32>
    %63 = vector.shape_cast %62 : vector<1x32xf32> to vector<1x1x32xf32>
    %64 = vector.broadcast %63 : vector<1x1x32xf32> to vector<8x8x32xf32>
    %65 = arith.addf %61, %64 : vector<8x8x32xf32>
    %cst = arith.constant dense<0.000000e+00> : vector<8x32xf32>
    %66 = vector.multi_reduction <add>, %65, %cst [0] : vector<8x8x32xf32> to vector<8x32xf32>
    %cst_47 = arith.constant dense<0.000000e+00> : vector<32xf32>
    %67 = vector.multi_reduction <add>, %66, %cst_47 [0] : vector<8x32xf32> to vector<32xf32>
    %68 = vector.shape_cast %67 : vector<32xf32> to vector<1x32xf32>
    %cst_48 = arith.constant 1.562500e-02 : f32
    %69 = vector.broadcast %cst_48 : f32 to vector<1x32xf32>
    %70 = arith.mulf %68, %69 : vector<1x32xf32>
    %c0_49 = arith.constant 0 : index
    %c0_50 = arith.constant 0 : index
    %71 = vector.load %arg6[%c0_49, %c0_50] : memref<32x2xf32, #tpu.memory_space<vmem>>, vector<32x2xf32>
    %cst_51 = arith.constant dense<0.000000e+00> : vector<1x2xf32>
    %72 = tpu.matmul %70, %71, %cst_51 {dimension_numbers = #tpu.dot_dimension_numbers<[1], [0], [0], [1], [0, 0, 1, 1], [], []>} : vector<1x32xf32>, vector<32x2xf32>, vector<1x2xf32> -> vector<1x2xf32>
    %c0_52 = arith.constant 0 : index
    %c0_53 = arith.constant 0 : index
    %73 = vector.load %arg7[%c0_52, %c0_53] : memref<1x2xf32, #tpu.memory_space<vmem>>, vector<1x2xf32>
    %74 = arith.addf %72, %73 : vector<1x2xf32>
    %cst_54 = arith.constant 0.000000e+00 : f32
    %75 = vector.broadcast %cst_54 : f32 to vector<1x2xf32>
    %76 = arith.maximumf %74, %75 : vector<1x2xf32>
    %c0_55 = arith.constant 0 : index
    %c0_56 = arith.constant 0 : index
    %77 = vector.load %arg8[%c0_55, %c0_56] : memref<2x32xf32, #tpu.memory_space<vmem>>, vector<2x32xf32>
    %cst_57 = arith.constant dense<0.000000e+00> : vector<1x32xf32>
    %78 = tpu.matmul %76, %77, %cst_57 {dimension_numbers = #tpu.dot_dimension_numbers<[1], [0], [0], [1], [0, 0, 1, 1], [], []>} : vector<1x2xf32>, vector<2x32xf32>, vector<1x32xf32> -> vector<1x32xf32>
    %c0_58 = arith.constant 0 : index
    %c0_59 = arith.constant 0 : index
    %79 = vector.load %arg9[%c0_58, %c0_59] : memref<1x32xf32, #tpu.memory_space<vmem>>, vector<1x32xf32>
    %80 = arith.addf %78, %79 : vector<1x32xf32>
    %cst_60 = arith.constant 0.000000e+00 : f32
    %81 = vector.broadcast %cst_60 : f32 to vector<1x32xf32>
    %82 = arith.subf %81, %80 : vector<1x32xf32>
    %83 = math.exp %82 : vector<1x32xf32>
    %cst_61 = arith.constant 1.000000e+00 : f32
    %84 = vector.broadcast %cst_61 : f32 to vector<1x32xf32>
    %85 = arith.addf %84, %83 : vector<1x32xf32>
    %cst_62 = arith.constant 1.000000e+00 : f32
    %86 = vector.broadcast %cst_62 : f32 to vector<1x32xf32>
    %87 = arith.divf %86, %85 : vector<1x32xf32>
    %88 = vector.shape_cast %87 : vector<1x32xf32> to vector<1x1x32xf32>
    %89 = vector.broadcast %88 : vector<1x1x32xf32> to vector<8x8x32xf32>
    %90 = arith.mulf %65, %89 : vector<8x8x32xf32>
    %cst_63 = arith.constant 0.000000e+00 : f32
    %91 = vector.broadcast %cst_63 : f32 to vector<8x8x32xf32>
    %92 = arith.maximumf %90, %91 : vector<8x8x32xf32>
    %93 = vector.shape_cast %92 : vector<8x8x32xf32> to vector<64x32xf32>
    %94 = arith.truncf %93 : vector<64x32xf32> to vector<64x32xbf16>
    %c0_64 = arith.constant 0 : index
    %c0_65 = arith.constant 0 : index
    %95 = vector.load %arg4[%c0_64, %c0_65] : memref<32x32xbf16, #tpu.memory_space<vmem>>, vector<32x32xbf16>
    %cst_66 = arith.constant dense<0.000000e+00> : vector<64x32xf32>
    %96 = tpu.matmul %94, %95, %cst_66 {dimension_numbers = #tpu.dot_dimension_numbers<[1], [0], [0], [1], [0, 0, 1, 1], [], []>} : vector<64x32xbf16>, vector<32x32xbf16>, vector<64x32xf32> -> vector<64x32xf32>
    %c0_67 = arith.constant 0 : index
    %c0_68 = arith.constant 0 : index
    %97 = vector.load %arg5[%c0_67, %c0_68] : memref<1x32xf32, #tpu.memory_space<vmem>>, vector<1x32xf32>
    %98 = vector.broadcast %97 : vector<1x32xf32> to vector<64x32xf32>
    %99 = arith.addf %96, %98 : vector<64x32xf32>
    %cst_69 = arith.constant dense<0.000000e+00> : vector<32xf32>
    %100 = vector.multi_reduction <add>, %99, %cst_69 [0] : vector<64x32xf32> to vector<32xf32>
    %101 = vector.shape_cast %100 : vector<32xf32> to vector<1x32xf32>
    %cst_70 = arith.constant 1.562500e-02 : f32
    %102 = vector.broadcast %cst_70 : f32 to vector<1x32xf32>
    %103 = arith.mulf %101, %102 : vector<1x32xf32>
    %c0_71 = arith.constant 0 : index
    %c0_72 = arith.constant 0 : index
    %104 = vector.load %arg10[%c0_71, %c0_72] : memref<32x2xf32, #tpu.memory_space<vmem>>, vector<32x2xf32>
    %cst_73 = arith.constant dense<0.000000e+00> : vector<1x2xf32>
    %105 = tpu.matmul %103, %104, %cst_73 {dimension_numbers = #tpu.dot_dimension_numbers<[1], [0], [0], [1], [0, 0, 1, 1], [], []>} : vector<1x32xf32>, vector<32x2xf32>, vector<1x2xf32> -> vector<1x2xf32>
    %c0_74 = arith.constant 0 : index
    %c0_75 = arith.constant 0 : index
    %106 = vector.load %arg11[%c0_74, %c0_75] : memref<1x2xf32, #tpu.memory_space<vmem>>, vector<1x2xf32>
    %107 = arith.addf %105, %106 : vector<1x2xf32>
    %cst_76 = arith.constant 0.000000e+00 : f32
    %108 = vector.broadcast %cst_76 : f32 to vector<1x2xf32>
    %109 = arith.maximumf %107, %108 : vector<1x2xf32>
    %c0_77 = arith.constant 0 : index
    %c0_78 = arith.constant 0 : index
    %110 = vector.load %arg12[%c0_77, %c0_78] : memref<2x32xf32, #tpu.memory_space<vmem>>, vector<2x32xf32>
    %cst_79 = arith.constant dense<0.000000e+00> : vector<1x32xf32>
    %111 = tpu.matmul %109, %110, %cst_79 {dimension_numbers = #tpu.dot_dimension_numbers<[1], [0], [0], [1], [0, 0, 1, 1], [], []>} : vector<1x2xf32>, vector<2x32xf32>, vector<1x32xf32> -> vector<1x32xf32>
    %c0_80 = arith.constant 0 : index
    %c0_81 = arith.constant 0 : index
    %112 = vector.load %arg13[%c0_80, %c0_81] : memref<1x32xf32, #tpu.memory_space<vmem>>, vector<1x32xf32>
    %113 = arith.addf %111, %112 : vector<1x32xf32>
    %cst_82 = arith.constant 0.000000e+00 : f32
    %114 = vector.broadcast %cst_82 : f32 to vector<1x32xf32>
    %115 = arith.subf %114, %113 : vector<1x32xf32>
    %116 = math.exp %115 : vector<1x32xf32>
    %cst_83 = arith.constant 1.000000e+00 : f32
    %117 = vector.broadcast %cst_83 : f32 to vector<1x32xf32>
    %118 = arith.addf %117, %116 : vector<1x32xf32>
    %cst_84 = arith.constant 1.000000e+00 : f32
    %119 = vector.broadcast %cst_84 : f32 to vector<1x32xf32>
    %120 = arith.divf %119, %118 : vector<1x32xf32>
    %121 = vector.broadcast %120 : vector<1x32xf32> to vector<64x32xf32>
    %122 = arith.mulf %99, %121 : vector<64x32xf32>
    %cst_85 = arith.constant 0.000000e+00 : f32
    %123 = vector.broadcast %cst_85 : f32 to vector<64x32xf32>
    %124 = arith.maximumf %122, %123 : vector<64x32xf32>
    %125 = vector.shape_cast %124 : vector<64x32xf32> to vector<8x8x32xf32>
    %c0_86 = arith.constant 0 : index
    %c0_87 = arith.constant 0 : index
    %c0_88 = arith.constant 0 : index
    %c0_89 = arith.constant 0 : index
    %126 = vector.load %arg14[%c0_86, %c0_87, %c0_88, %c0_89] : memref<1x8x8x32xf32, #tpu.memory_space<vmem>>, vector<1x8x8x32xf32>
    %127 = vector.shape_cast %126 : vector<1x8x8x32xf32> to vector<8x8x32xf32>
    %128 = vector.shape_cast %125 : vector<8x8x32xf32> to vector<1x8x8x32xf32>
    tpu.vector_store %arg14[%c0_86, %c0_87, %c0_88, %c0_89], %128 {strides = array<i32>} : memref<1x8x8x32xf32, #tpu.memory_space<vmem>>, vector<1x8x8x32xf32>,
    return
  }
  func.func @transform_0(%arg0: i32) -> (i32, i32, i32, i32) {
    %c0_i32 = arith.constant 0 : i32
    %c0_i32_0 = arith.constant 0 : i32
    %c0_i32_1 = arith.constant 0 : i32
    %c0_i32_2 = arith.constant 0 : i32
    return %arg0, %c0_i32, %c0_i32_0, %c0_i32_1 : i32, i32, i32, i32
  }
  func.func @transform_1(%arg0: i32) -> (i32, i32) {
    %c0_i32 = arith.constant 0 : i32
    %c0_i32_0 = arith.constant 0 : i32
    %c0_i32_1 = arith.constant 0 : i32
    return %c0_i32, %c0_i32_0 : i32, i32
  }
  func.func @transform_2(%arg0: i32) -> (i32, i32) {
    %c0_i32 = arith.constant 0 : i32
    %c0_i32_0 = arith.constant 0 : i32
    %c0_i32_1 = arith.constant 0 : i32
    return %c0_i32, %c0_i32_0 : i32, i32
  }
  func.func @transform_3(%arg0: i32) -> (i32, i32) {
    %c0_i32 = arith.constant 0 : i32
    %c0_i32_0 = arith.constant 0 : i32
    %c0_i32_1 = arith.constant 0 : i32
    return %c0_i32, %c0_i32_0 : i32, i32
  }
  func.func @transform_4(%arg0: i32) -> (i32, i32) {
    %c0_i32 = arith.constant 0 : i32
    %c0_i32_0 = arith.constant 0 : i32
    %c0_i32_1 = arith.constant 0 : i32
    return %c0_i32, %c0_i32_0 : i32, i32
  }
  func.func @transform_5(%arg0: i32) -> (i32, i32) {
    %c0_i32 = arith.constant 0 : i32
    %c0_i32_0 = arith.constant 0 : i32
    %c0_i32_1 = arith.constant 0 : i32
    return %c0_i32, %c0_i32_0 : i32, i32
  }
  func.func @transform_6(%arg0: i32) -> (i32, i32) {
    %c0_i32 = arith.constant 0 : i32
    %c0_i32_0 = arith.constant 0 : i32
    %c0_i32_1 = arith.constant 0 : i32
    return %c0_i32, %c0_i32_0 : i32, i32
  }
  func.func @transform_7(%arg0: i32) -> (i32, i32) {
    %c0_i32 = arith.constant 0 : i32
    %c0_i32_0 = arith.constant 0 : i32
    %c0_i32_1 = arith.constant 0 : i32
    return %c0_i32, %c0_i32_0 : i32, i32
  }
  func.func @transform_8(%arg0: i32) -> (i32, i32) {
    %c0_i32 = arith.constant 0 : i32
    %c0_i32_0 = arith.constant 0 : i32
    %c0_i32_1 = arith.constant 0 : i32
    return %c0_i32, %c0_i32_0 : i32, i32
  }
  func.func @transform_9(%arg0: i32) -> (i32, i32) {
    %c0_i32 = arith.constant 0 : i32
    %c0_i32_0 = arith.constant 0 : i32
    %c0_i32_1 = arith.constant 0 : i32
    return %c0_i32, %c0_i32_0 : i32, i32
  }
  func.func @transform_10(%arg0: i32) -> (i32, i32) {
    %c0_i32 = arith.constant 0 : i32
    %c0_i32_0 = arith.constant 0 : i32
    %c0_i32_1 = arith.constant 0 : i32
    return %c0_i32, %c0_i32_0 : i32, i32
  }
  func.func @transform_11(%arg0: i32) -> (i32, i32) {
    %c0_i32 = arith.constant 0 : i32
    %c0_i32_0 = arith.constant 0 : i32
    %c0_i32_1 = arith.constant 0 : i32
    return %c0_i32, %c0_i32_0 : i32, i32
  }
  func.func @transform_12(%arg0: i32) -> (i32, i32) {
    %c0_i32 = arith.constant 0 : i32
    %c0_i32_0 = arith.constant 0 : i32
    %c0_i32_1 = arith.constant 0 : i32
    return %c0_i32, %c0_i32_0 : i32, i32
  }
  func.func @transform_13(%arg0: i32) -> (i32, i32, i32, i32) {
    %c0_i32 = arith.constant 0 : i32
    %c0_i32_0 = arith.constant 0 : i32
    %c0_i32_1 = arith.constant 0 : i32
    %c0_i32_2 = arith.constant 0 : i32
    return %arg0, %c0_i32, %c0_i32_0, %c0_i32_1 : i32, i32, i32, i32
  }
}

</mosaic_0001>

<llo_original>
// kernel: _lambda_.2
$region0: #{_lambda_.2}
  #allocation0 [shape = 'u32[]', space=smem, size = 0x4, offset = 0x4, fixed_abs, tag = 'smem constant byte address 0x4 - core index']
  #allocation1 [shape = 'u32[144,128]{1,0:T(1,128)}', space=vmem, size = 0x12000, scoped, tag = 'internal scratch']
  %s0 = inlined_call_operand.vmem [shape: f32[2,36,9,16], index: 0, kind: input, shape index: {}]
  %s1 = inlined_call_operand.vmem [shape: f32[9,16], index: 1, kind: input, shape index: {}]
  %s2 = inlined_call_operand.vmem [shape: f32[1,16], index: 2, kind: input, shape index: {}]
  %s3 = inlined_call_operand.vmem [shape: bf16[16,32], index: 3, kind: input, shape index: {}]
  %s4 = inlined_call_operand.vmem [shape: f32[1,32], index: 4, kind: input, shape index: {}]
  %s5 = inlined_call_operand.vmem [shape: f32[2,8,8,32], index: 5, kind: output, shape index: {}]
  %s6 = sld [smem:[#allocation0]]
  $region53: #{_lambda_.2} parent=0
    _
  %s8 = ssub.s32 1, %s6
  %s9 = scalar_select 0, %s8, %s6
  loop: start=0, step=1, limit=4
  $region2: #{_lambda_.2} parent=0 // loop_pre_header
    _
  $region3: #{_lambda_.2} parent=0 // loop_header
    %s11 = sphi 0, %s15
    %p12 = scmp.ge.s32.totalorder %s11, 4
    %s21 = sphi 0, %s23
    %s24 = sphi 0, %s21
    %s25 = sphi 0, %s24
    %s41 = sphi 0, %s25
    %s45 = sphi 0, %s45
    %s47 = sphi 0, %s45
    %s48 = sphi 0, %s47
    %s62 = sphi 0, %s48
    %s66 = sphi 0, %s66
    %s68 = sphi 0, %s66
    %s69 = sphi 0, %s68
    %s83 = sphi 0, %s69
    %s87 = sphi 0, %s87
    %s89 = sphi 0, %s87
    %s90 = sphi 0, %s89
    %s104 = sphi 0, %s90
    %s108 = sphi 0, %s108
    %s110 = sphi 0, %s108
    %s111 = sphi 0, %s110
    %s125 = sphi 0, %s111
    %s131 = sphi 0, %s133
    %s134 = sphi 0, %s131
    %s135 = sphi 0, %s134
    %s151 = sphi 0, %s135
  $region4: #{_lambda_.2} parent=0 // loop_header_branch
    %14 = sbr.rel (%p12) target = $region8
  $region5: #{_lambda_.2} parent=0 // loop_body
    %s16 = ssub.s32 %s11, 1
    %s17 = ssub.s32 %s11, 2
    %s18 = sadd.s32 %s11, 1
    %s19 = ssub.s32 %s11, %s18
    %p20 = scmp.eq.s32.totalorder %s19, 0
    %s22 = sadd.s32 %s21, 1
    %s23 = scalar_select %p20, %s21, %s22
    %p26 = pneg %p20
    %p27 = scmp.eq.s32.totalorder %s11, 1
    %p28 = por %p26, %p27
    %p29 = scmp.ne.s32.totalorder %s21, %s24
    %p30 = scmp.eq.s32.totalorder %s11, 0
    %p31 = por %p29, %p30
    %p32 = scmp.ne.s32.totalorder %s21, %s24
    %p33 = scmp.eq.s32.totalorder %s16, 1
    %p34 = por %p32, %p33
    %p35 = scmp.ne.s32.totalorder %s24, %s25
    %p36 = scmp.eq.s32.totalorder %s16, 0
    %p37 = por %p35, %p36
    %p38 = scmp.ne.s32.totalorder %s24, %s25
    %p39 = scmp.eq.s32.totalorder %s17, 1
    %p40 = por %p38, %p39
    %p42 = scmp.ne.s32.totalorder %s25, %s41
    %p43 = scmp.eq.s32.totalorder %s17, 0
    %p44 = por %p42, %p43
    %s46 = sadd.s32 %s45, 1
    %p49 = scmp.eq.s32.totalorder %s11, 1
    %p50 = scmp.ne.s32.totalorder %s45, %s47
    %p51 = scmp.eq.s32.totalorder %s11, 0
    %p52 = por %p50, %p51
    %p53 = scmp.ne.s32.totalorder %s45, %s47
    %p54 = scmp.eq.s32.totalorder %s16, 1
    %p55 = por %p53, %p54
    %p56 = scmp.ne.s32.totalorder %s47, %s48
    %p57 = scmp.eq.s32.totalorder %s16, 0
    %p58 = por %p56, %p57
    %p59 = scmp.ne.s32.totalorder %s47, %s48
    %p60 = scmp.eq.s32.totalorder %s17, 1
    %p61 = por %p59, %p60
    %p63 = scmp.ne.s32.totalorder %s48, %s62
    %p64 = scmp.eq.s32.totalorder %s17, 0
    %p65 = por %p63, %p64
    %s67 = sadd.s32 %s66, 1
    %p70 = scmp.eq.s32.totalorder %s11, 1
    %p71 = scmp.ne.s32.totalorder %s66, %s68
    %p72 = scmp.eq.s32.totalorder %s11, 0
    %p73 = por %p71, %p72
    %p74 = scmp.ne.s32.totalorder %s66, %s68
    %p75 = scmp.eq.s32.totalorder %s16, 1
    %p76 = por %p74, %p75
    %p77 = scmp.ne.s32.totalorder %s68, %s69
    %p78 = scmp.eq.s32.totalorder %s16, 0
    %p79 = por %p77, %p78
    %p80 = scmp.ne.s32.totalorder %s68, %s69
    %p81 = scmp.eq.s32.totalorder %s17, 1
    %p82 = por %p80, %p81
    %p84 = scmp.ne.s32.totalorder %s69, %s83
    %p85 = scmp.eq.s32.totalorder %s17, 0
    %p86 = por %p84, %p85
    %s88 = sadd.s32 %s87, 1
    %p91 = scmp.eq.s32.totalorder %s11, 1
    %p92 = scmp.ne.s32.totalorder %s87, %s89
    %p93 = scmp.eq.s32.totalorder %s11, 0
    %p94 = por %p92, %p93
    %p95 = scmp.ne.s32.totalorder %s87, %s89
    %p96 = scmp.eq.s32.totalorder %s16, 1
    %p97 = por %p95, %p96
    %p98 = scmp.ne.s32.totalorder %s89, %s90
    %p99 = scmp.eq.s32.totalorder %s16, 0
    %p100 = por %p98, %p99
    %p101 = scmp.ne.s32.totalorder %s89, %s90
    %p102 = scmp.eq.s32.totalorder %s17, 1
    %p103 = por %p101, %p102
    %p105 = scmp.ne.s32.totalorder %s90, %s104
    %p106 = scmp.eq.s32.totalorder %s17, 0
    %p107 = por %p105, %p106
    %s109 = sadd.s32 %s108, 1
    %p112 = scmp.eq.s32.totalorder %s11, 1
    %p113 = scmp.ne.s32.totalorder %s108, %s110
    %p114 = scmp.eq.s32.totalorder %s11, 0
    %p115 = por %p113, %p114
    %p116 = scmp.ne.s32.totalorder %s108, %s110
    %p117 = scmp.eq.s32.totalorder %s16, 1
    %p118 = por %p116, %p117
    %p119 = scmp.ne.s32.totalorder %s110, %s111
    %p120 = scmp.eq.s32.totalorder %s16, 0
    %p121 = por %p119, %p120
    %p122 = scmp.ne.s32.totalorder %s110, %s111
    %p123 = scmp.eq.s32.totalorder %s17, 1
    %p124 = por %p122, %p123
    %p126 = scmp.ne.s32.totalorder %s111, %s125
    %p127 = scmp.eq.s32.totalorder %s17, 0
    %p128 = por %p126, %p127
    %s129 = ssub.s32 %s11, %s18
    %p130 = scmp.eq.s32.totalorder %s129, 0
    %s132 = sadd.s32 %s131, 1
    %s133 = scalar_select %p130, %s131, %s132
    %p136 = pneg %p130
    %p137 = scmp.eq.s32.totalorder %s11, 1
    %p138 = por %p136, %p137
    %p139 = scmp.ne.s32.totalorder %s131, %s134
    %p140 = scmp.eq.s32.totalorder %s11, 0
    %p141 = por %p139, %p140
    %p142 = scmp.ne.s32.totalorder %s131, %s134
    %p143 = scmp.eq.s32.totalorder %s16, 1
    %p144 = por %p142, %p143
    %p145 = scmp.ne.s32.totalorder %s134, %s135
    %p146 = scmp.eq.s32.totalorder %s16, 0
    %p147 = por %p145, %p146
    %p148 = scmp.ne.s32.totalorder %s134, %s135
    %p149 = scmp.eq.s32.totalorder %s17, 1
    %p150 = por %p148, %p149
    %p152 = scmp.ne.s32.totalorder %s135, %s151
    %p153 = scmp.eq.s32.totalorder %s17, 0
    %p154 = por %p152, %p153
    %p155 = scmp.le.s32.totalorder 1, %s11
    %p156 = scmp.lt.s32.totalorder %s11, 3
    %p157 = pnand %p155, %p156
    %p158 = pneg %p157
    // Predicated region
    $region9: #{_lambda_.2} parent=5 // pred_check
      _
    $region10: #{_lambda_.2} parent=5 // pred_check_branch
      %160 = sbr.rel (%p157) target = $region12
    $region11: #{_lambda_.2} parent=5 // pred_region
      %s161 = ssub.s32 %s11, 1
      // Predicated region
      $region13: #{_lambda_.2} parent=11 // pred_check
        %p162 = pneg %p58
      $region14: #{_lambda_.2} parent=11 // pred_check_branch
        %164 = sbr.rel (%p162) target = $region16
      $region15: #{_lambda_.2} parent=11 // pred_region
        _
      $region16: #{_lambda_.2} parent=11 // pred_fallthru
        _
      // Predicated region
      $region17: #{_lambda_.2} parent=11 // pred_check
        %p165 = pneg %p79
      $region18: #{_lambda_.2} parent=11 // pred_check_branch
        %167 = sbr.rel (%p165) target = $region20
      $region19: #{_lambda_.2} parent=11 // pred_region
        _
      $region20: #{_lambda_.2} parent=11 // pred_fallthru
        _
      // Predicated region
      $region21: #{_lambda_.2} parent=11 // pred_check
        %p168 = pneg %p100
      $region22: #{_lambda_.2} parent=11 // pred_check_branch
        %170 = sbr.rel (%p168) target = $region24
      $region23: #{_lambda_.2} parent=11 // pred_region
        _
      $region24: #{_lambda_.2} parent=11 // pred_fallthru
        _
      // Predicated region
      $region25: #{_lambda_.2} parent=11 // pred_check
        %p171 = pneg %p121
      $region26: #{_lambda_.2} parent=11 // pred_check_branch
        %173 = sbr.rel (%p171) target = $region28
      $region27: #{_lambda_.2} parent=11 // pred_region
        _
      $region28: #{_lambda_.2} parent=11 // pred_fallthru
        _
    $region12: #{_lambda_.2} parent=5 // pred_fallthru
      _
    %p174 = scmp.lt.s32.totalorder %s11, 2
    // Predicated region
    $region29: #{_lambda_.2} parent=5 // pred_check
      %p175 = pneg %p174
    $region30: #{_lambda_.2} parent=5 // pred_check_branch
      %177 = sbr.rel (%p175) target = $region32
    $region31: #{_lambda_.2} parent=5 // pred_region
      // Predicated region
      $region33: #{_lambda_.2} parent=31 // pred_check
        %p178 = pneg %p31
      $region34: #{_lambda_.2} parent=31 // pred_check_branch
        %180 = sbr.rel (%p178) target = $region36
      $region35: #{_lambda_.2} parent=31 // pred_region
        %p181 = scmp.lt.s32.totalorder %s11, 1
        %s182 = scalar_select %p181, %s11, 1
        %s183 = smul.addr %s182, 72
        %s184 = smul.addr %s183, 8
        %s185 = scalar_lea.vmem %s0, %s184
      $region36: #{_lambda_.2} parent=31 // pred_fallthru
        _
    $region32: #{_lambda_.2} parent=5 // pred_fallthru
      _
    %p186 = scmp.le.s32.totalorder 1, %s11
    %p187 = scmp.lt.s32.totalorder %s11, 3
    %p188 = pnand %p186, %p187
    %p189 = pneg %p188
    // Predicated region
    $region37: #{_lambda_.2} parent=5 // pred_check
      _
    $region38: #{_lambda_.2} parent=5 // pred_check_branch
      %191 = sbr.rel (%p188) target = $region40
    $region39: #{_lambda_.2} parent=5 // pred_region
      %s192 = ssub.s32 %s11, 1
      %p193 = scmp.lt.s32.totalorder %s16, 1
      %s194 = scalar_select %p193, %s16, 1
      %s195 = smul.addr %s194, 72
      %s196 = smul.addr %s195, 8
      %s197 = scalar_lea.vmem %s0, %s196
      %p198 = pneg %p37
      %p199 = pneg %p34
      %p200 = pneg %p58
      %p201 = pneg %p55
      %p202 = pneg %p79
      %p203 = pneg %p76
      %p204 = pneg %p100
      %p205 = pneg %p97
      %p206 = pneg %p121
      %p207 = pneg %p118
      %p208 = pneg %p147
      %p209 = pneg %p144
      %p210 = scmp.lt.s32.totalorder %s16, 1
      %s211 = scalar_select %p210, %s16, 1
      %s212 = smul.addr %s211, 8
      %s213 = smul.addr %s212, 8
      %s214 = scalar_lea.vmem %s5, %s213
      %p215 = scmp.lt.s32.totalorder %s16, 1
      %s216 = scalar_select %p215, %s16, 1
      %s217 = smul.addr %s216, 72
      %s218 = smul.addr %s217, 8
      %s219 = scalar_lea.vmem %s0, %s218
      %p220 = scmp.lt.s32.totalorder %s16, 1
      %s221 = scalar_select %p220, %s16, 1
      %s222 = smul.addr %s221, 8
      %s223 = smul.addr %s222, 8
      %s224 = scalar_lea.vmem %s5, %s223
      %v226 = vld [vmem:[%s219] sm:$0xff]
      %v227 = vld [vmem:[%s219 + $0x10] sm:$0xff]
      %v228 = vld [vmem:[%s219 + $0x20] sm:$0xff]
      %v229 = vld [vmem:[%s219 + $0x30] sm:$0xff]
      %v230 = vld [vmem:[%s219 + $0x40] sm:$0xff]
      %v231 = vld [vmem:[%s219 + $0x50] sm:$0xff]
      %v232 = vld [vmem:[%s219 + $0x60] sm:$0xff]
      %v233 = vld [vmem:[%s219 + $0x70] sm:$0xff]
      %v234 = vld [vmem:[%s1] sm:$0x1]
      %v235 = vlaneseq
      %v236 = vshrl.u32 %v235, 7
      %v237 = vsub.s32 0, %v236
      %v238 = vrot.slane %v234, %v237
      %v239 = vmul.f32 %v226, %v238
      %v240 = vmul.f32 %v227, %v238
      %v241 = vmul.f32 %v228, %v238
      %v242 = vmul.f32 %v229, %v238
      %v243 = vmul.f32 %v230, %v238
      %v244 = vmul.f32 %v231, %v238
      %v245 = vmul.f32 %v232, %v238
      %v246 = vmul.f32 %v233, %v238
      %s247 = scalar_lea.vmem %s219, 144
      %v248 = vld [vmem:[%s247] sm:$0xff]
      %v249 = vld [vmem:[%s247 + $0x10] sm:$0xff]
      %v250 = vld [vmem:[%s247 + $0x20] sm:$0xff]
      %v251 = vld [vmem:[%s247 + $0x30] sm:$0xff]
      %v252 = vld [vmem:[%s247 + $0x40] sm:$0xff]
      %v253 = vld [vmem:[%s247 + $0x50] sm:$0xff]
      %v254 = vld [vmem:[%s247 + $0x60] sm:$0xff]
      %v255 = vld [vmem:[%s247 + $0x70] sm:$0xff]
      %v256 = vld [vmem:[%s1 + $0x1] sm:$0x1]
      %v257 = vlaneseq
      %v258 = vshrl.u32 %v257, 7
      %v259 = vsub.s32 0, %v258
      %v260 = vrot.slane %v256, %v259
      %v261 = vmul.f32 %v248, %v260
      %v262 = vmul.f32 %v249, %v260
      %v263 = vmul.f32 %v250, %v260
      %v264 = vmul.f32 %v251, %v260
      %v265 = vmul.f32 %v252, %v260
      %v266 = vmul.f32 %v253, %v260
      %v267 = vmul.f32 %v254, %v260
      %v268 = vmul.f32 %v255, %v260
      %v269 = vadd.f32 %v239, %v261
      %v270 = vadd.f32 %v240, %v262
      %v271 = vadd.f32 %v241, %v263
      %v272 = vadd.f32 %v242, %v264
      %v273 = vadd.f32 %v243, %v265
      %v274 = vadd.f32 %v244, %v266
      %v275 = vadd.f32 %v245, %v267
      %v276 = vadd.f32 %v246, %v268
      %v277 = vld [vmem:[%s219 + $0x1] sm:$0xff]
      %v278 = vld [vmem:[%s219 + $0x11] sm:$0xff]
      %v279 = vld [vmem:[%s219 + $0x21] sm:$0xff]
      %v280 = vld [vmem:[%s219 + $0x31] sm:$0xff]
      %v281 = vld [vmem:[%s219 + $0x41] sm:$0xff]
      %v282 = vld [vmem:[%s219 + $0x51] sm:$0xff]
      %v283 = vld [vmem:[%s219 + $0x61] sm:$0xff]
      %v284 = vld [vmem:[%s219 + $0x71] sm:$0xff]
      %v285 = vld [vmem:[%s1 + $0x2] sm:$0x1]
      %v286 = vlaneseq
      %v287 = vshrl.u32 %v286, 7
      %v288 = vsub.s32 0, %v287
      %v289 = vrot.slane %v285, %v288
      %v290 = vmul.f32 %v277, %v289
      %v291 = vmul.f32 %v278, %v289
      %v292 = vmul.f32 %v279, %v289
      %v293 = vmul.f32 %v280, %v289
      %v294 = vmul.f32 %v281, %v289
      %v295 = vmul.f32 %v282, %v289
      %v296 = vmul.f32 %v283, %v289
      %v297 = vmul.f32 %v284, %v289
      %v298 = vadd.f32 %v269, %v290
      %v299 = vadd.f32 %v270, %v291
      %v300 = vadd.f32 %v271, %v292
      %v301 = vadd.f32 %v272, %v293
      %v302 = vadd.f32 %v273, %v294
      %v303 = vadd.f32 %v274, %v295
      %v304 = vadd.f32 %v275, %v296
      %v305 = vadd.f32 %v276, %v297
      %s306 = scalar_lea.vmem %s219, 288
      %v307 = vld [vmem:[%s306] sm:$0xff]
      %v308 = vld [vmem:[%s306 + $0x10] sm:$0xff]
      %v309 = vld [vmem:[%s306 + $0x20] sm:$0xff]
      %v310 = vld [vmem:[%s306 + $0x30] sm:$0xff]
      %v311 = vld [vmem:[%s306 + $0x40] sm:$0xff]
      %v312 = vld [vmem:[%s306 + $0x50] sm:$0xff]
      %v313 = vld [vmem:[%s306 + $0x60] sm:$0xff]
      %v314 = vld [vmem:[%s306 + $0x70] sm:$0xff]
      %v315 = vld [vmem:[%s1 + $0x3] sm:$0x1]
      %v316 = vlaneseq
      %v317 = vshrl.u32 %v316, 7
      %v318 = vsub.s32 0, %v317
      %v319 = vrot.slane %v315, %v318
      %v320 = vmul.f32 %v307, %v319
      %v321 = vmul.f32 %v308, %v319
      %v322 = vmul.f32 %v309, %v319
      %v323 = vmul.f32 %v310, %v319
      %v324 = vmul.f32 %v311, %v319
      %v325 = vmul.f32 %v312, %v319
      %v326 = vmul.f32 %v313, %v319
      %v327 = vmul.f32 %v314, %v319
      %v328 = vadd.f32 %v298, %v320
      %v329 = vadd.f32 %v299, %v321
      %v330 = vadd.f32 %v300, %v322
      %v331 = vadd.f32 %v301, %v323
      %v332 = vadd.f32 %v302, %v324
      %v333 = vadd.f32 %v303, %v325
      %v334 = vadd.f32 %v304, %v326
      %v335 = vadd.f32 %v305, %v327
      %s336 = scalar_lea.vmem %s219, 432
      %v337 = vld [vmem:[%s336] sm:$0xff]
      %v338 = vld [vmem:[%s336 + $0x10] sm:$0xff]
      %v339 = vld [vmem:[%s336 + $0x20] sm:$0xff]
      %v340 = vld [vmem:[%s336 + $0x30] sm:$0xff]
      %v341 = vld [vmem:[%s336 + $0x40] sm:$0xff]
      %v342 = vld [vmem:[%s336 + $0x50] sm:$0xff]
      %v343 = vld [vmem:[%s336 + $0x60] sm:$0xff]
      %v344 = vld [vmem:[%s336 + $0x70] sm:$0xff]
      %v345 = vld [vmem:[%s1 + $0x4] sm:$0x1]
      %v346 = vlaneseq
      %v347 = vshrl.u32 %v346, 7
      %v348 = vsub.s32 0, %v347
      %v349 = vrot.slane %v345, %v348
      %v350 = vmul.f32 %v337, %v349
      %v351 = vmul.f32 %v338, %v349
      %v352 = vmul.f32 %v339, %v349
      %v353 = vmul.f32 %v340, %v349
      %v354 = vmul.f32 %v341, %v349
      %v355 = vmul.f32 %v342, %v349
      %v356 = vmul.f32 %v343, %v349
      %v357 = vmul.f32 %v344, %v349
      %v358 = vadd.f32 %v328, %v350
      %v359 = vadd.f32 %v329, %v351
      %v360 = vadd.f32 %v330, %v352
      %v361 = vadd.f32 %v331, %v353
      %v362 = vadd.f32 %v332, %v354
      %v363 = vadd.f32 %v333, %v355
      %v364 = vadd.f32 %v334, %v356
      %v365 = vadd.f32 %v335, %v357
      %v366 = vld [vmem:[%s306 + $0x1] sm:$0xff]
      %v367 = vld [vmem:[%s306 + $0x11] sm:$0xff]
      %v368 = vld [vmem:[%s306 + $0x21] sm:$0xff]
      %v369 = vld [vmem:[%s306 + $0x31] sm:$0xff]
      %v370 = vld [vmem:[%s306 + $0x41] sm:$0xff]
      %v371 = vld [vmem:[%s306 + $0x51] sm:$0xff]
      %v372 = vld [vmem:[%s306 + $0x61] sm:$0xff]
      %v373 = vld [vmem:[%s306 + $0x71] sm:$0xff]
      %v374 = vld [vmem:[%s1 + $0x5] sm:$0x1]
      %v375 = vlaneseq
      %v376 = vshrl.u32 %v375, 7
      %v377 = vsub.s32 0, %v376
      %v378 = vrot.slane %v374, %v377
      %v379 = vmul.f32 %v366, %v378
      %v380 = vmul.f32 %v367, %v378
      %v381 = vmul.f32 %v368, %v378
      %v382 = vmul.f32 %v369, %v378
      %v383 = vmul.f32 %v370, %v378
      %v384 = vmul.f32 %v371, %v378
      %v385 = vmul.f32 %v372, %v378
      %v386 = vmul.f32 %v373, %v378
      %v387 = vadd.f32 %v358, %v379
      %v388 = vadd.f32 %v359, %v380
      %v389 = vadd.f32 %v360, %v381
      %v390 = vadd.f32 %v361, %v382
      %v391 = vadd.f32 %v362, %v383
      %v392 = vadd.f32 %v363, %v384
      %v393 = vadd.f32 %v364, %v385
      %v394 = vadd.f32 %v365, %v386
      %s395 = scalar_lea.vmem %s219, 16
      %v396 = vld [vmem:[%s395] sm:$0xff]
      %v397 = vld [vmem:[%s395 + $0x10] sm:$0xff]
      %v398 = vld [vmem:[%s395 + $0x20] sm:$0xff]
      %v399 = vld [vmem:[%s395 + $0x30] sm:$0xff]
      %v400 = vld [vmem:[%s395 + $0x40] sm:$0xff]
      %v401 = vld [vmem:[%s395 + $0x50] sm:$0xff]
      %v402 = vld [vmem:[%s395 + $0x60] sm:$0xff]
      %v403 = vld [vmem:[%s395 + $0x70] sm:$0xff]
      %v404 = vld [vmem:[%s1 + $0x6] sm:$0x1]
      %v405 = vlaneseq
      %v406 = vshrl.u32 %v405, 7
      %v407 = vsub.s32 0, %v406
      %v408 = vrot.slane %v404, %v407
      %v409 = vmul.f32 %v396, %v408
      %v410 = vmul.f32 %v397, %v408
      %v411 = vmul.f32 %v398, %v408
      %v412 = vmul.f32 %v399, %v408
      %v413 = vmul.f32 %v400, %v408
      %v414 = vmul.f32 %v401, %v408
      %v415 = vmul.f32 %v402, %v408
      %v416 = vmul.f32 %v403, %v408
      %v417 = vadd.f32 %v387, %v409
      %v418 = vadd.f32 %v388, %v410
      %v419 = vadd.f32 %v389, %v411
      %v420 = vadd.f32 %v390, %v412
      %v421 = vadd.f32 %v391, %v413
      %v422 = vadd.f32 %v392, %v414
      %v423 = vadd.f32 %v393, %v415
      %v424 = vadd.f32 %v394, %v416
      %s425 = scalar_lea.vmem %s219, 160
      %v426 = vld [vmem:[%s425] sm:$0xff]
      %v427 = vld [vmem:[%s425 + $0x10] sm:$0xff]
      %v428 = vld [vmem:[%s425 + $0x20] sm:$0xff]
      %v429 = vld [vmem:[%s425 + $0x30] sm:$0xff]
      %v430 = vld [vmem:[%s425 + $0x40] sm:$0xff]
      %v431 = vld [vmem:[%s425 + $0x50] sm:$0xff]
      %v432 = vld [vmem:[%s425 + $0x60] sm:$0xff]
      %v433 = vld [vmem:[%s425 + $0x70] sm:$0xff]
      %v434 = vld [vmem:[%s1 + $0x7] sm:$0x1]
      %v435 = vlaneseq
      %v436 = vshrl.u32 %v435, 7
      %v437 = vsub.s32 0, %v436
      %v438 = vrot.slane %v434, %v437
      %v439 = vmul.f32 %v426, %v438
      %v440 = vmul.f32 %v427, %v438
      %v441 = vmul.f32 %v428, %v438
      %v442 = vmul.f32 %v429, %v438
      %v443 = vmul.f32 %v430, %v438
      %v444 = vmul.f32 %v431, %v438
      %v445 = vmul.f32 %v432, %v438
      %v446 = vmul.f32 %v433, %v438
      %v447 = vadd.f32 %v417, %v439
      %v448 = vadd.f32 %v418, %v440
      %v449 = vadd.f32 %v419, %v441
      %v450 = vadd.f32 %v420, %v442
      %v451 = vadd.f32 %v421, %v443
      %v452 = vadd.f32 %v422, %v444
      %v453 = vadd.f32 %v423, %v445
      %v454 = vadd.f32 %v424, %v446
      %v455 = vld [vmem:[%s395 + $0x1] sm:$0xff]
      %v456 = vld [vmem:[%s395 + $0x11] sm:$0xff]
      %v457 = vld [vmem:[%s395 + $0x21] sm:$0xff]
      %v458 = vld [vmem:[%s395 + $0x31] sm:$0xff]
      %v459 = vld [vmem:[%s395 + $0x41] sm:$0xff]
      %v460 = vld [vmem:[%s395 + $0x51] sm:$0xff]
      %v461 = vld [vmem:[%s395 + $0x61] sm:$0xff]
      %v462 = vld [vmem:[%s395 + $0x71] sm:$0xff]
      %v463 = vld [vmem:[%s1 + $0x8] sm:$0x1]
      %v464 = vlaneseq
      %v465 = vshrl.u32 %v464, 7
      %v466 = vsub.s32 0, %v465
      %v467 = vrot.slane %v463, %v466
      %v468 = vmul.f32 %v455, %v467
      %v469 = vmul.f32 %v456, %v467
      %v470 = vmul.f32 %v457, %v467
      %v471 = vmul.f32 %v458, %v467
      %v472 = vmul.f32 %v459, %v467
      %v473 = vmul.f32 %v460, %v467
      %v474 = vmul.f32 %v461, %v467
      %v475 = vmul.f32 %v462, %v467
      %v476 = vadd.f32 %v447, %v468
      %v477 = vadd.f32 %v448, %v469
      %v478 = vadd.f32 %v449, %v470
      %v479 = vadd.f32 %v450, %v471
      %v480 = vadd.f32 %v451, %v472
      %v481 = vadd.f32 %v452, %v473
      %v482 = vadd.f32 %v453, %v474
      %v483 = vadd.f32 %v454, %v475
      %v484 = vld [vmem:[%s2] sm:$0x1]
      %v486 = vlaneseq
      %v487 = vshrl.u32 %v486, 7
      %v488 = vsub.s32 0, %v487
      %v489 = vrot.slane %v484, %v488
      %v491 = vadd.f32 %v476, %v489
      %v492 = vadd.f32 %v477, %v489
      %v493 = vadd.f32 %v478, %v489
      %v494 = vadd.f32 %v479, %v489
      %v495 = vadd.f32 %v480, %v489
      %v496 = vadd.f32 %v481, %v489
      %v497 = vadd.f32 %v482, %v489
      %v498 = vadd.f32 %v483, %v489
      %v499 = vmax.f32 %v491, 0.0
      %v500 = vmax.f32 %v492, 0.0
      %v501 = vmax.f32 %v493, 0.0
      %v502 = vmax.f32 %v494, 0.0
      %v503 = vmax.f32 %v495, 0.0
      %v504 = vmax.f32 %v496, 0.0
      %v505 = vmax.f32 %v497, 0.0
      %v506 = vmax.f32 %v498, 0.0
      %v507 = vpack.c.bf16 %v500, %v499
      %v508 = vpack.c.bf16 %v502, %v501
      %v509 = vpack.c.bf16 %v504, %v503
      %v510 = vpack.c.bf16 %v506, %v505
      %v511 = vld [vmem:[%s3] sm:$0xf]
      %v512 = vld [vmem:[%s3 + $0x4] sm:$0xf]
      %v513 = vld [vmem:[%s4] sm:$0x1]
      %v515 = vlaneseq
      %v516 = vshrl.u32 %v515, 7
      %v517 = vsub.s32 0, %v516
      %v518 = vrot.slane %v513, %v517
      %v522 = vunpack.c.l.b16 %v511
      %v523 = vunpack.c.l.b16 %v512
      %v524 = vpack.c.b16 %v523, %v522
      %vm526 = vcmask 130048
      %v528 = vsel %vm526, %v507, 0
      %v531 = vsel %vm526, %v508, 0
      %v534 = vsel %vm526, %v509, 0
      %v537 = vsel %vm526, %v510, 0
      %539 = vmatprep.subr.bf16.mxu0 0
      %540 = vmatpush1.bf16.msra.mxu0 0
      %541 = vmatprep.subr.bf16.mxu0 0
      %542 = vmatpush1.bf16.msra.mxu0 0
      %543 = vmatprep.subr.bf16.mxu0 0
      %544 = vmatpush1.bf16.msra.mxu0 0
      %545 = vmatprep.subr.bf16.mxu0 0
      %546 = vmatpush1.bf16.msra.mxu0 0
      %547 = vmatprep.subr.bf16.mxu0 0
      %548 = vmatpush1.bf16.msra.mxu0 0
      %549 = vmatprep.subr.bf16.mxu0 0
      %550 = vmatpush1.bf16.msra.mxu0 0
      %551 = vmatprep.subr.bf16.mxu0 0
      %552 = vmatpush1.bf16.msra.mxu0 0
      %553 = vmatprep.subr.bf16.mxu0 0
      %554 = vmatpush1.bf16.msra.mxu0 %v524
      %555 = vmatprep.subr.bf16.mxu0 0
      %556 = vmatpush2.bf16.msra.mxu0 0
      %557 = vmatprep.subr.bf16.mxu0 0
      %558 = vmatpush2.bf16.msra.mxu0 0
      %559 = vmatprep.subr.bf16.mxu0 0
      %560 = vmatpush2.bf16.msra.mxu0 0
      %561 = vmatprep.subr.bf16.mxu0 0
      %562 = vmatpush2.bf16.msra.mxu0 0
      %563 = vmatprep.subr.bf16.mxu0 0
      %564 = vmatpush2.bf16.msra.mxu0 0
      %565 = vmatprep.subr.bf16.mxu0 0
      %566 = vmatpush2.bf16.msra.mxu0 0
      %567 = vmatprep.subr.bf16.mxu0 0
      %568 = vmatpush2.bf16.msra.mxu0 0
      %569 = vmatprep.subr.bf16.mxu0 0
      %570 = vmatpush2.bf16.msra.mxu0 0
      %571 = vmatprep.mubr.bf16.mxu0 0
      %572 = vmatmul.mubr.bf16.gmra.mxu0 %v528
      %v573 = vpop.f32.mrf.mxu0
      %v574 = vadd.f32 %v518, %v573
      %v575 = vpop.f32.mrf.mxu0
      %v576 = vpop.f32.mrf.mxu0
      %v577 = vadd.f32 %v518, %v576
      %v578 = vpop.f32.mrf.mxu0
      %579 = vmatprep.mubr.bf16.mxu0 0
      %580 = vmatmul.mubr.bf16.gmra.mxu0 %v531
      %v581 = vpop.f32.mrf.mxu0
      %v582 = vadd.f32 %v518, %v581
      %v583 = vpop.f32.mrf.mxu0
      %v584 = vpop.f32.mrf.mxu0
      %v585 = vadd.f32 %v518, %v584
      %v586 = vpop.f32.mrf.mxu0
      %587 = vmatprep.mubr.bf16.mxu0 0
      %588 = vmatmul.mubr.bf16.gmra.mxu0 %v534
      %v589 = vpop.f32.mrf.mxu0
      %v590 = vadd.f32 %v518, %v589
      %v591 = vpop.f32.mrf.mxu0
      %v592 = vpop.f32.mrf.mxu0
      %v593 = vadd.f32 %v518, %v592
      %v594 = vpop.f32.mrf.mxu0
      %595 = vmatprep.mubr.bf16.mxu0 0
      %596 = vmatmul.mubr.bf16.gmra.mxu0 %v537
      %v597 = vpop.f32.mrf.mxu0
      %v598 = vadd.f32 %v518, %v597
      %v599 = vpop.f32.mrf.mxu0
      %v600 = vpop.f32.mrf.mxu0
      %v601 = vadd.f32 %v518, %v600
      %v602 = vpop.f32.mrf.mxu0
      %603 = vdwg.mxu0
      %v604 = vmax.f32 %v574, 0.0
      %v605 = vmax.f32 %v577, 0.0
      %v606 = vmax.f32 %v582, 0.0
      %v607 = vmax.f32 %v585, 0.0
      %v608 = vmax.f32 %v590, 0.0
      %v609 = vmax.f32 %v593, 0.0
      %v610 = vmax.f32 %v598, 0.0
      %v611 = vmax.f32 %v601, 0.0
      %vm612 = vcmask 261120
      %613 = vst.msk [vmem:[%s224] sm:$0xff] %vm612, %v604
      %614 = vst.msk [vmem:[%s224 + $0x8] sm:$0xff] %vm612, %v605
      %615 = vst.msk [vmem:[%s224 + $0x10] sm:$0xff] %vm612, %v606
      %616 = vst.msk [vmem:[%s224 + $0x18] sm:$0xff] %vm612, %v607
      %617 = vst.msk [vmem:[%s224 + $0x20] sm:$0xff] %vm612, %v608
      %618 = vst.msk [vmem:[%s224 + $0x28] sm:$0xff] %vm612, %v609
      %619 = vst.msk [vmem:[%s224 + $0x30] sm:$0xff] %vm612, %v610
      %620 = vst.msk [vmem:[%s224 + $0x38] sm:$0xff] %vm612, %v611
      %p621 = scmp.lt.s32.totalorder %s16, 1
      %s622 = scalar_select %p621, %s16, 1
      %s623 = smul.addr %s622, 8
      %s624 = smul.addr %s623, 8
      %s625 = scalar_lea.vmem %s5, %s624
      // Predicated region
      $region41: #{_lambda_.2} parent=39 // pred_check
        %p626 = pneg %p144
      $region42: #{_lambda_.2} parent=39 // pred_check_branch
        %628 = sbr.rel (%p626) target = $region44
      $region43: #{_lambda_.2} parent=39 // pred_region
        _
      $region44: #{_lambda_.2} parent=39 // pred_fallthru
        _
    $region40: #{_lambda_.2} parent=5 // pred_fallthru
      _
    %p629 = scmp.le.s32.totalorder 2, %s11
    // Predicated region
    $region45: #{_lambda_.2} parent=5 // pred_check
      %p630 = pneg %p629
    $region46: #{_lambda_.2} parent=5 // pred_check_branch
      %632 = sbr.rel (%p630) target = $region48
    $region47: #{_lambda_.2} parent=5 // pred_region
      %s633 = ssub.s32 %s11, 2
      // Predicated region
      $region49: #{_lambda_.2} parent=47 // pred_check
        %p634 = pneg %p150
      $region50: #{_lambda_.2} parent=47 // pred_check_branch
        %636 = sbr.rel (%p634) target = $region52
      $region51: #{_lambda_.2} parent=47 // pred_region
        %p637 = scmp.lt.s32.totalorder %s17, 1
        %s638 = scalar_select %p637, %s17, 1
        %s639 = smul.addr %s638, 8
        %s640 = smul.addr %s639, 8
        %s641 = scalar_lea.vmem %s5, %s640
      $region52: #{_lambda_.2} parent=47 // pred_fallthru
        _
    $region48: #{_lambda_.2} parent=5 // pred_fallthru
      _
  $region6: #{_lambda_.2} parent=0 // loop_footer
    %s15 = sadd.s32 1, %s11
  $region7: #{_lambda_.2} parent=0 // loop_footer_branch
    %10 = sbr.rel target = $region3
  $region8: #{_lambda_.2} parent=0 // loop_exit
    _

// kernel: _lambda_.3
$region0: #{_lambda_.3}
  #allocation0 [shape = 'u32[]', space=smem, size = 0x4, offset = 0x4, fixed_abs, tag = 'smem constant byte address 0x4 - core index']
  #allocation1 [shape = 'u32[144,128]{1,0:T(1,128)}', space=vmem, size = 0x12000, scoped, tag = 'internal scratch']
  %s0 = inlined_call_operand.vmem [shape: f32[2,10,10,32], index: 0, kind: input, shape index: {}]
  %s1 = inlined_call_operand.vmem [shape: f32[9,32], index: 1, kind: input, shape index: {}]
  %s2 = inlined_call_operand.vmem [shape: f32[1,32], index: 2, kind: input, shape index: {}]
  %s3 = inlined_call_operand.vmem [shape: bf16[32,32], index: 3, kind: input, shape index: {}]
  %s4 = inlined_call_operand.vmem [shape: f32[1,32], index: 4, kind: input, shape index: {}]
  %s5 = inlined_call_operand.vmem [shape: f32[32,2], index: 5, kind: input, shape index: {}]
  %s6 = inlined_call_operand.vmem [shape: f32[1,2], index: 6, kind: input, shape index: {}]
  %s7 = inlined_call_operand.vmem [shape: f32[2,32], index: 7, kind: input, shape index: {}]
  %s8 = inlined_call_operand.vmem [shape: f32[1,32], index: 8, kind: input, shape index: {}]
  %s9 = inlined_call_operand.vmem [shape: f32[32,2], index: 9, kind: input, shape index: {}]
  %s10 = inlined_call_operand.vmem [shape: f32[1,2], index: 10, kind: input, shape index: {}]
  %s11 = inlined_call_operand.vmem [shape: f32[2,32], index: 11, kind: input, shape index: {}]
  %s12 = inlined_call_operand.vmem [shape: f32[1,32], index: 12, kind: input, shape index: {}]
  %s13 = inlined_call_operand.hbm [shape: f32[2,8,8,32], index: 13, kind: output, shape index: {}]
  %s14 = sld [smem:[#allocation0]]
  $region85: #{_lambda_.3} parent=0
    _
  %s16 = ssub.s32 1, %s14
  %s17 = scalar_select 0, %s16, %s14
  $region1: #{_lambda_.3} parent=0
    #allocation2 [shape = 'u8[65536]{0}', space=vmem, size = 0x10000, scoped, tag = 'output window, operand 0']
    #allocation3 [shape = 's32[2]{0}', space=sflag, size = 0x8, scoped, tag = 'scoped memory for _lambda_.3']
    %18 = vsyncpa [#allocation3], 0
    %s19 = scalar_lea.sflag [#allocation3], 1
    %20 = vsyncpa %s19, 0
    loop: start=0, step=1, limit=4
    $region2: #{_lambda_.3} parent=1 // loop_pre_header
      _
    $region3: #{_lambda_.3} parent=1 // loop_header
      %s22 = sphi 0, %s26
      %p23 = scmp.ge.s32.totalorder %s22, 4
      %s32 = sphi 0, %s34
      %s35 = sphi 0, %s32
      %s36 = sphi 0, %s35
      %s52 = sphi 0, %s36
      %s56 = sphi 0, %s56
      %s58 = sphi 0, %s56
      %s59 = sphi 0, %s58
      %s73 = sphi 0, %s59
      %s77 = sphi 0, %s77
      %s79 = sphi 0, %s77
      %s80 = sphi 0, %s79
      %s94 = sphi 0, %s80
      %s98 = sphi 0, %s98
      %s100 = sphi 0, %s98
      %s101 = sphi 0, %s100
      %s115 = sphi 0, %s101
      %s119 = sphi 0, %s119
      %s121 = sphi 0, %s119
      %s122 = sphi 0, %s121
      %s136 = sphi 0, %s122
      %s140 = sphi 0, %s140
      %s142 = sphi 0, %s140
      %s143 = sphi 0, %s142
      %s157 = sphi 0, %s143
      %s161 = sphi 0, %s161
      %s163 = sphi 0, %s161
      %s164 = sphi 0, %s163
      %s178 = sphi 0, %s164
      %s182 = sphi 0, %s182
      %s184 = sphi 0, %s182
      %s185 = sphi 0, %s184
      %s199 = sphi 0, %s185
      %s203 = sphi 0, %s203
      %s205 = sphi 0, %s203
      %s206 = sphi 0, %s205
      %s220 = sphi 0, %s206
      %s224 = sphi 0, %s224
      %s226 = sphi 0, %s224
      %s227 = sphi 0, %s226
      %s241 = sphi 0, %s227
      %s245 = sphi 0, %s245
      %s247 = sphi 0, %s245
      %s248 = sphi 0, %s247
      %s262 = sphi 0, %s248
      %s266 = sphi 0, %s266
      %s268 = sphi 0, %s266
      %s269 = sphi 0, %s268
      %s283 = sphi 0, %s269
      %s287 = sphi 0, %s287
      %s289 = sphi 0, %s287
      %s290 = sphi 0, %s289
      %s304 = sphi 0, %s290
      %s310 = sphi 0, %s312
      %s313 = sphi 0, %s310
      %s314 = sphi 0, %s313
      %s330 = sphi 0, %s314
    $region4: #{_lambda_.3} parent=1 // loop_header_branch
      %25 = sbr.rel (%p23) target = $region8
    $region5: #{_lambda_.3} parent=1 // loop_body
      %s27 = ssub.s32 %s22, 1
      %s28 = ssub.s32 %s22, 2
      %s29 = sadd.s32 %s22, 1
      %s30 = ssub.s32 %s22, %s29
      %p31 = scmp.eq.s32.totalorder %s30, 0
      %s33 = sadd.s32 %s32, 1
      %s34 = scalar_select %p31, %s32, %s33
      %p37 = pneg %p31
      %p38 = scmp.eq.s32.totalorder %s22, 1
      %p39 = por %p37, %p38
      %p40 = scmp.ne.s32.totalorder %s32, %s35
      %p41 = scmp.eq.s32.totalorder %s22, 0
      %p42 = por %p40, %p41
      %p43 = scmp.ne.s32.totalorder %s32, %s35
      %p44 = scmp.eq.s32.totalorder %s27, 1
      %p45 = por %p43, %p44
      %p46 = scmp.ne.s32.totalorder %s35, %s36
      %p47 = scmp.eq.s32.totalorder %s27, 0
      %p48 = por %p46, %p47
      %p49 = scmp.ne.s32.totalorder %s35, %s36
      %p50 = scmp.eq.s32.totalorder %s28, 1
      %p51 = por %p49, %p50
      %p53 = scmp.ne.s32.totalorder %s36, %s52
      %p54 = scmp.eq.s32.totalorder %s28, 0
      %p55 = por %p53, %p54
      %s57 = sadd.s32 %s56, 1
      %p60 = scmp.eq.s32.totalorder %s22, 1
      %p61 = scmp.ne.s32.totalorder %s56, %s58
      %p62 = scmp.eq.s32.totalorder %s22, 0
      %p63 = por %p61, %p62
      %p64 = scmp.ne.s32.totalorder %s56, %s58
      %p65 = scmp.eq.s32.totalorder %s27, 1
      %p66 = por %p64, %p65
      %p67 = scmp.ne.s32.totalorder %s58, %s59
      %p68 = scmp.eq.s32.totalorder %s27, 0
      %p69 = por %p67, %p68
      %p70 = scmp.ne.s32.totalorder %s58, %s59
      %p71 = scmp.eq.s32.totalorder %s28, 1
      %p72 = por %p70, %p71
      %p74 = scmp.ne.s32.totalorder %s59, %s73
      %p75 = scmp.eq.s32.totalorder %s28, 0
      %p76 = por %p74, %p75
      %s78 = sadd.s32 %s77, 1
      %p81 = scmp.eq.s32.totalorder %s22, 1
      %p82 = scmp.ne.s32.totalorder %s77, %s79
      %p83 = scmp.eq.s32.totalorder %s22, 0
      %p84 = por %p82, %p83
      %p85 = scmp.ne.s32.totalorder %s77, %s79
      %p86 = scmp.eq.s32.totalorder %s27, 1
      %p87 = por %p85, %p86
      %p88 = scmp.ne.s32.totalorder %s79, %s80
      %p89 = scmp.eq.s32.totalorder %s27, 0
      %p90 = por %p88, %p89
      %p91 = scmp.ne.s32.totalorder %s79, %s80
      %p92 = scmp.eq.s32.totalorder %s28, 1
      %p93 = por %p91, %p92
      %p95 = scmp.ne.s32.totalorder %s80, %s94
      %p96 = scmp.eq.s32.totalorder %s28, 0
      %p97 = por %p95, %p96
      %s99 = sadd.s32 %s98, 1
      %p102 = scmp.eq.s32.totalorder %s22, 1
      %p103 = scmp.ne.s32.totalorder %s98, %s100
      %p104 = scmp.eq.s32.totalorder %s22, 0
      %p105 = por %p103, %p104
      %p106 = scmp.ne.s32.totalorder %s98, %s100
      %p107 = scmp.eq.s32.totalorder %s27, 1
      %p108 = por %p106, %p107
      %p109 = scmp.ne.s32.totalorder %s100, %s101
      %p110 = scmp.eq.s32.totalorder %s27, 0
      %p111 = por %p109, %p110
      %p112 = scmp.ne.s32.totalorder %s100, %s101
      %p113 = scmp.eq.s32.totalorder %s28, 1
      %p114 = por %p112, %p113
      %p116 = scmp.ne.s32.totalorder %s101, %s115
      %p117 = scmp.eq.s32.totalorder %s28, 0
      %p118 = por %p116, %p117
      %s120 = sadd.s32 %s119, 1
      %p123 = scmp.eq.s32.totalorder %s22, 1
      %p124 = scmp.ne.s32.totalorder %s119, %s121
      %p125 = scmp.eq.s32.totalorder %s22, 0
      %p126 = por %p124, %p125
      %p127 = scmp.ne.s32.totalorder %s119, %s121
      %p128 = scmp.eq.s32.totalorder %s27, 1
      %p129 = por %p127, %p128
      %p130 = scmp.ne.s32.totalorder %s121, %s122
      %p131 = scmp.eq.s32.totalorder %s27, 0
      %p132 = por %p130, %p131
      %p133 = scmp.ne.s32.totalorder %s121, %s122
      %p134 = scmp.eq.s32.totalorder %s28, 1
      %p135 = por %p133, %p134
      %p137 = scmp.ne.s32.totalorder %s122, %s136
      %p138 = scmp.eq.s32.totalorder %s28, 0
      %p139 = por %p137, %p138
      %s141 = sadd.s32 %s140, 1
      %p144 = scmp.eq.s32.totalorder %s22, 1
      %p145 = scmp.ne.s32.totalorder %s140, %s142
      %p146 = scmp.eq.s32.totalorder %s22, 0
      %p147 = por %p145, %p146
      %p148 = scmp.ne.s32.totalorder %s140, %s142
      %p149 = scmp.eq.s32.totalorder %s27, 1
      %p150 = por %p148, %p149
      %p151 = scmp.ne.s32.totalorder %s142, %s143
      %p152 = scmp.eq.s32.totalorder %s27, 0
      %p153 = por %p151, %p152
      %p154 = scmp.ne.s32.totalorder %s142, %s143
      %p155 = scmp.eq.s32.totalorder %s28, 1
      %p156 = por %p154, %p155
      %p158 = scmp.ne.s32.totalorder %s143, %s157
      %p159 = scmp.eq.s32.totalorder %s28, 0
      %p160 = por %p158, %p159
      %s162 = sadd.s32 %s161, 1
      %p165 = scmp.eq.s32.totalorder %s22, 1
      %p166 = scmp.ne.s32.totalorder %s161, %s163
      %p167 = scmp.eq.s32.totalorder %s22, 0
      %p168 = por %p166, %p167
      %p169 = scmp.ne.s32.totalorder %s161, %s163
      %p170 = scmp.eq.s32.totalorder %s27, 1
      %p171 = por %p169, %p170
      %p172 = scmp.ne.s32.totalorder %s163, %s164
      %p173 = scmp.eq.s32.totalorder %s27, 0
      %p174 = por %p172, %p173
      %p175 = scmp.ne.s32.totalorder %s163, %s164
      %p176 = scmp.eq.s32.totalorder %s28, 1
      %p177 = por %p175, %p176
      %p179 = scmp.ne.s32.totalorder %s164, %s178
      %p180 = scmp.eq.s32.totalorder %s28, 0
      %p181 = por %p179, %p180
      %s183 = sadd.s32 %s182, 1
      %p186 = scmp.eq.s32.totalorder %s22, 1
      %p187 = scmp.ne.s32.totalorder %s182, %s184
      %p188 = scmp.eq.s32.totalorder %s22, 0
      %p189 = por %p187, %p188
      %p190 = scmp.ne.s32.totalorder %s182, %s184
      %p191 = scmp.eq.s32.totalorder %s27, 1
      %p192 = por %p190, %p191
      %p193 = scmp.ne.s32.totalorder %s184, %s185
      %p194 = scmp.eq.s32.totalorder %s27, 0
      %p195 = por %p193, %p194
      %p196 = scmp.ne.s32.totalorder %s184, %s185
      %p197 = scmp.eq.s32.totalorder %s28, 1
      %p198 = por %p196, %p197
      %p200 = scmp.ne.s32.totalorder %s185, %s199
      %p201 = scmp.eq.s32.totalorder %s28, 0
      %p202 = por %p200, %p201
      %s204 = sadd.s32 %s203, 1
      %p207 = scmp.eq.s32.totalorder %s22, 1
      %p208 = scmp.ne.s32.totalorder %s203, %s205
      %p209 = scmp.eq.s32.totalorder %s22, 0
      %p210 = por %p208, %p209
      %p211 = scmp.ne.s32.totalorder %s203, %s205
      %p212 = scmp.eq.s32.totalorder %s27, 1
      %p213 = por %p211, %p212
      %p214 = scmp.ne.s32.totalorder %s205, %s206
      %p215 = scmp.eq.s32.totalorder %s27, 0
      %p216 = por %p214, %p215
      %p217 = scmp.ne.s32.totalorder %s205, %s206
      %p218 = scmp.eq.s32.totalorder %s28, 1
      %p219 = por %p217, %p218
      %p221 = scmp.ne.s32.totalorder %s206, %s220
      %p222 = scmp.eq.s32.totalorder %s28, 0
      %p223 = por %p221, %p222
      %s225 = sadd.s32 %s224, 1
      %p228 = scmp.eq.s32.totalorder %s22, 1
      %p229 = scmp.ne.s32.totalorder %s224, %s226
      %p230 = scmp.eq.s32.totalorder %s22, 0
      %p231 = por %p229, %p230
      %p232 = scmp.ne.s32.totalorder %s224, %s226
      %p233 = scmp.eq.s32.totalorder %s27, 1
      %p234 = por %p232, %p233
      %p235 = scmp.ne.s32.totalorder %s226, %s227
      %p236 = scmp.eq.s32.totalorder %s27, 0
      %p237 = por %p235, %p236
      %p238 = scmp.ne.s32.totalorder %s226, %s227
      %p239 = scmp.eq.s32.totalorder %s28, 1
      %p240 = por %p238, %p239
      %p242 = scmp.ne.s32.totalorder %s227, %s241
      %p243 = scmp.eq.s32.totalorder %s28, 0
      %p244 = por %p242, %p243
      %s246 = sadd.s32 %s245, 1
      %p249 = scmp.eq.s32.totalorder %s22, 1
      %p250 = scmp.ne.s32.totalorder %s245, %s247
      %p251 = scmp.eq.s32.totalorder %s22, 0
      %p252 = por %p250, %p251
      %p253 = scmp.ne.s32.totalorder %s245, %s247
      %p254 = scmp.eq.s32.totalorder %s27, 1
      %p255 = por %p253, %p254
      %p256 = scmp.ne.s32.totalorder %s247, %s248
      %p257 = scmp.eq.s32.totalorder %s27, 0
      %p258 = por %p256, %p257
      %p259 = scmp.ne.s32.totalorder %s247, %s248
      %p260 = scmp.eq.s32.totalorder %s28, 1
      %p261 = por %p259, %p260
      %p263 = scmp.ne.s32.totalorder %s248, %s262
      %p264 = scmp.eq.s32.totalorder %s28, 0
      %p265 = por %p263, %p264
      %s267 = sadd.s32 %s266, 1
      %p270 = scmp.eq.s32.totalorder %s22, 1
      %p271 = scmp.ne.s32.totalorder %s266, %s268
      %p272 = scmp.eq.s32.totalorder %s22, 0
      %p273 = por %p271, %p272
      %p274 = scmp.ne.s32.totalorder %s266, %s268
      %p275 = scmp.eq.s32.totalorder %s27, 1
      %p276 = por %p274, %p275
      %p277 = scmp.ne.s32.totalorder %s268, %s269
      %p278 = scmp.eq.s32.totalorder %s27, 0
      %p279 = por %p277, %p278
      %p280 = scmp.ne.s32.totalorder %s268, %s269
      %p281 = scmp.eq.s32.totalorder %s28, 1
      %p282 = por %p280, %p281
      %p284 = scmp.ne.s32.totalorder %s269, %s283
      %p285 = scmp.eq.s32.totalorder %s28, 0
      %p286 = por %p284, %p285
      %s288 = sadd.s32 %s287, 1
      %p291 = scmp.eq.s32.totalorder %s22, 1
      %p292 = scmp.ne.s32.totalorder %s287, %s289
      %p293 = scmp.eq.s32.totalorder %s22, 0
      %p294 = por %p292, %p293
      %p295 = scmp.ne.s32.totalorder %s287, %s289
      %p296 = scmp.eq.s32.totalorder %s27, 1
      %p297 = por %p295, %p296
      %p298 = scmp.ne.s32.totalorder %s289, %s290
      %p299 = scmp.eq.s32.totalorder %s27, 0
      %p300 = por %p298, %p299
      %p301 = scmp.ne.s32.totalorder %s289, %s290
      %p302 = scmp.eq.s32.totalorder %s28, 1
      %p303 = por %p301, %p302
      %p305 = scmp.ne.s32.totalorder %s290, %s304
      %p306 = scmp.eq.s32.totalorder %s28, 0
      %p307 = por %p305, %p306
      %s308 = ssub.s32 %s22, %s29
      %p309 = scmp.eq.s32.totalorder %s308, 0
      %s311 = sadd.s32 %s310, 1
      %s312 = scalar_select %p309, %s310, %s311
      %p315 = pneg %p309
      %p316 = scmp.eq.s32.totalorder %s22, 1
      %p317 = por %p315, %p316
      %p318 = scmp.ne.s32.totalorder %s310, %s313
      %p319 = scmp.eq.s32.totalorder %s22, 0
      %p320 = por %p318, %p319
      %p321 = scmp.ne.s32.totalorder %s310, %s313
      %p322 = scmp.eq.s32.totalorder %s27, 1
      %p323 = por %p321, %p322
      %p324 = scmp.ne.s32.totalorder %s313, %s314
      %p325 = scmp.eq.s32.totalorder %s27, 0
      %p326 = por %p324, %p325
      %p327 = scmp.ne.s32.totalorder %s313, %s314
      %p328 = scmp.eq.s32.totalorder %s28, 1
      %p329 = por %p327, %p328
      %p331 = scmp.ne.s32.totalorder %s314, %s330
      %p332 = scmp.eq.s32.totalorder %s28, 0
      %p333 = por %p331, %p332
      %p334 = scmp.le.s32.totalorder 1, %s22
      %p335 = scmp.lt.s32.totalorder %s22, 3
      %p336 = pnand %p334, %p335
      %p337 = pneg %p336
      // Predicated region
      $region9: #{_lambda_.3} parent=5 // pred_check
        _
      $region10: #{_lambda_.3} parent=5 // pred_check_branch
        %339 = sbr.rel (%p336) target = $region12
      $region11: #{_lambda_.3} parent=5 // pred_region
        %s340 = ssub.s32 %s22, 1
        // Predicated region
        $region13: #{_lambda_.3} parent=11 // pred_check
          %p341 = pneg %p69
        $region14: #{_lambda_.3} parent=11 // pred_check_branch
          %343 = sbr.rel (%p341) target = $region16
        $region15: #{_lambda_.3} parent=11 // pred_region
          _
        $region16: #{_lambda_.3} parent=11 // pred_fallthru
          _
        // Predicated region
        $region17: #{_lambda_.3} parent=11 // pred_check
          %p344 = pneg %p90
        $region18: #{_lambda_.3} parent=11 // pred_check_branch
          %346 = sbr.rel (%p344) target = $region20
        $region19: #{_lambda_.3} parent=11 // pred_region
          _
        $region20: #{_lambda_.3} parent=11 // pred_fallthru
          _
        // Predicated region
        $region21: #{_lambda_.3} parent=11 // pred_check
          %p347 = pneg %p111
        $region22: #{_lambda_.3} parent=11 // pred_check_branch
          %349 = sbr.rel (%p347) target = $region24
        $region23: #{_lambda_.3} parent=11 // pred_region
          _
        $region24: #{_lambda_.3} parent=11 // pred_fallthru
          _
        // Predicated region
        $region25: #{_lambda_.3} parent=11 // pred_check
          %p350 = pneg %p132
        $region26: #{_lambda_.3} parent=11 // pred_check_branch
          %352 = sbr.rel (%p350) target = $region28
        $region27: #{_lambda_.3} parent=11 // pred_region
          _
        $region28: #{_lambda_.3} parent=11 // pred_fallthru
          _
        // Predicated region
        $region29: #{_lambda_.3} parent=11 // pred_check
          %p353 = pneg %p153
        $region30: #{_lambda_.3} parent=11 // pred_check_branch
          %355 = sbr.rel (%p353) target = $region32
        $region31: #{_lambda_.3} parent=11 // pred_region
          _
        $region32: #{_lambda_.3} parent=11 // pred_fallthru
          _
        // Predicated region
        $region33: #{_lambda_.3} parent=11 // pred_check
          %p356 = pneg %p174
        $region34: #{_lambda_.3} parent=11 // pred_check_branch
          %358 = sbr.rel (%p356) target = $region36
        $region35: #{_lambda_.3} parent=11 // pred_region
          _
        $region36: #{_lambda_.3} parent=11 // pred_fallthru
          _
        // Predicated region
        $region37: #{_lambda_.3} parent=11 // pred_check
          %p359 = pneg %p195
        $region38: #{_lambda_.3} parent=11 // pred_check_branch
          %361 = sbr.rel (%p359) target = $region40
        $region39: #{_lambda_.3} parent=11 // pred_region
          _
        $region40: #{_lambda_.3} parent=11 // pred_fallthru
          _
        // Predicated region
        $region41: #{_lambda_.3} parent=11 // pred_check
          %p362 = pneg %p216
        $region42: #{_lambda_.3} parent=11 // pred_check_branch
          %364 = sbr.rel (%p362) target = $region44
        $region43: #{_lambda_.3} parent=11 // pred_region
          _
        $region44: #{_lambda_.3} parent=11 // pred_fallthru
          _
        // Predicated region
        $region45: #{_lambda_.3} parent=11 // pred_check
          %p365 = pneg %p237
        $region46: #{_lambda_.3} parent=11 // pred_check_branch
          %367 = sbr.rel (%p365) target = $region48
        $region47: #{_lambda_.3} parent=11 // pred_region
          _
        $region48: #{_lambda_.3} parent=11 // pred_fallthru
          _
        // Predicated region
        $region49: #{_lambda_.3} parent=11 // pred_check
          %p368 = pneg %p258
        $region50: #{_lambda_.3} parent=11 // pred_check_branch
          %370 = sbr.rel (%p368) target = $region52
        $region51: #{_lambda_.3} parent=11 // pred_region
          _
        $region52: #{_lambda_.3} parent=11 // pred_fallthru
          _
        // Predicated region
        $region53: #{_lambda_.3} parent=11 // pred_check
          %p371 = pneg %p279
        $region54: #{_lambda_.3} parent=11 // pred_check_branch
          %373 = sbr.rel (%p371) target = $region56
        $region55: #{_lambda_.3} parent=11 // pred_region
          _
        $region56: #{_lambda_.3} parent=11 // pred_fallthru
          _
        // Predicated region
        $region57: #{_lambda_.3} parent=11 // pred_check
          %p374 = pneg %p300
        $region58: #{_lambda_.3} parent=11 // pred_check_branch
          %376 = sbr.rel (%p374) target = $region60
        $region59: #{_lambda_.3} parent=11 // pred_region
          _
        $region60: #{_lambda_.3} parent=11 // pred_fallthru
          _
      $region12: #{_lambda_.3} parent=5 // pred_fallthru
        _
      %p377 = scmp.lt.s32.totalorder %s22, 2
      // Predicated region
      $region61: #{_lambda_.3} parent=5 // pred_check
        %p378 = pneg %p377
      $region62: #{_lambda_.3} parent=5 // pred_check_branch
        %380 = sbr.rel (%p378) target = $region64
      $region63: #{_lambda_.3} parent=5 // pred_region
        // Predicated region
        $region65: #{_lambda_.3} parent=63 // pred_check
          %p381 = pneg %p42
        $region66: #{_lambda_.3} parent=63 // pred_check_branch
          %383 = sbr.rel (%p381) target = $region68
        $region67: #{_lambda_.3} parent=63 // pred_region
          %p384 = scmp.lt.s32.totalorder %s22, 1
          %s385 = scalar_select %p384, %s22, 1
          %s386 = smul.addr %s385, 20
          %s387 = smul.addr %s386, 8
          %s388 = scalar_lea.vmem %s0, %s387
        $region68: #{_lambda_.3} parent=63 // pred_fallthru
          _
      $region64: #{_lambda_.3} parent=5 // pred_fallthru
        _
      %p389 = scmp.le.s32.totalorder 1, %s22
      %p390 = scmp.lt.s32.totalorder %s22, 3
      %p391 = pnand %p389, %p390
      %p392 = pneg %p391
      // Predicated region
      $region69: #{_lambda_.3} parent=5 // pred_check
        _
      $region70: #{_lambda_.3} parent=5 // pred_check_branch
        %394 = sbr.rel (%p391) target = $region72
      $region71: #{_lambda_.3} parent=5 // pred_region
        %s395 = ssub.s32 %s22, 1
        %p396 = scmp.lt.s32.totalorder %s27, 1
        %s397 = scalar_select %p396, %s27, 1
        %s398 = smul.addr %s397, 20
        %s399 = smul.addr %s398, 8
        %s400 = scalar_lea.vmem %s0, %s399
        %p401 = pneg %p48
        %p402 = pneg %p45
        %p403 = pneg %p69
        %p404 = pneg %p66
        %p405 = pneg %p90
        %p406 = pneg %p87
        %p407 = pneg %p111
        %p408 = pneg %p108
        %p409 = pneg %p132
        %p410 = pneg %p129
        %p411 = pneg %p153
        %p412 = pneg %p150
        %p413 = pneg %p174
        %p414 = pneg %p171
        %p415 = pneg %p195
        %p416 = pneg %p192
        %p417 = pneg %p216
        %p418 = pneg %p213
        %p419 = pneg %p237
        %p420 = pneg %p234
        %p421 = pneg %p258
        %p422 = pneg %p255
        %p423 = pneg %p279
        %p424 = pneg %p276
        %p425 = pneg %p300
        %p426 = pneg %p297
        %p427 = pneg %p326
        %p428 = pneg %p323
        %s429 = sand.u32 %s313, 1
        %s430 = scalar_lea.sflag [#allocation3], %s429
        %s431 = sand.u32 %s313, 1
        %s432 = smul.addr %s431, 64
        %s433 = scalar_lea.vmem [#allocation2], %s432
        %p434 = scmp.lt.s32.totalorder %s27, 1
        %s435 = scalar_select %p434, %s27, 1
        %s436 = smul.addr %s435, 20
        %s437 = smul.addr %s436, 8
        %s438 = scalar_lea.vmem %s0, %s437
        %v440 = vld [vmem:[%s438] sm:$0xff]
        %v441 = vld [vmem:[%s438 + $0x10] sm:$0xff]
        %v442 = vld [vmem:[%s438 + $0x20] sm:$0xff]
        %v443 = vld [vmem:[%s438 + $0x30] sm:$0xff]
        %v444 = vld [vmem:[%s438 + $0x40] sm:$0xff]
        %v445 = vld [vmem:[%s438 + $0x50] sm:$0xff]
        %v446 = vld [vmem:[%s438 + $0x60] sm:$0xff]
        %v447 = vld [vmem:[%s438 + $0x70] sm:$0xff]
        %v448 = vld [vmem:[%s1] sm:$0x1]
        %v449 = vlaneseq
        %v450 = vshrl.u32 %v449, 7
        %v451 = vsub.s32 0, %v450
        %v452 = vrot.slane %v448, %v451
        %v453 = vmul.f32 %v440, %v452
        %v454 = vmul.f32 %v441, %v452
        %v455 = vmul.f32 %v442, %v452
        %v456 = vmul.f32 %v443, %v452
        %v457 = vmul.f32 %v444, %v452
        %v458 = vmul.f32 %v445, %v452
        %v459 = vmul.f32 %v446, %v452
        %v460 = vmul.f32 %v447, %v452
        %v461 = vld [vmem:[%s438 + $0x1] sm:$0xff]
        %v462 = vld [vmem:[%s438 + $0x11] sm:$0xff]
        %v463 = vld [vmem:[%s438 + $0x21] sm:$0xff]
        %v464 = vld [vmem:[%s438 + $0x31] sm:$0xff]
        %v465 = vld [vmem:[%s438 + $0x41] sm:$0xff]
        %v466 = vld [vmem:[%s438 + $0x51] sm:$0xff]
        %v467 = vld [vmem:[%s438 + $0x61] sm:$0xff]
        %v468 = vld [vmem:[%s438 + $0x71] sm:$0xff]
        %v469 = vld [vmem:[%s1 + $0x1] sm:$0x1]
        %v470 = vlaneseq
        %v471 = vshrl.u32 %v470, 7
        %v472 = vsub.s32 0, %v471
        %v473 = vrot.slane %v469, %v472
        %v474 = vmul.f32 %v461, %v473
        %v475 = vmul.f32 %v462, %v473
        %v476 = vmul.f32 %v463, %v473
        %v477 = vmul.f32 %v464, %v473
        %v478 = vmul.f32 %v465, %v473
        %v479 = vmul.f32 %v466, %v473
        %v480 = vmul.f32 %v467, %v473
        %v481 = vmul.f32 %v468, %v473
        %v482 = vadd.f32 %v453, %v474
        %v483 = vadd.f32 %v454, %v475
        %v484 = vadd.f32 %v455, %v476
        %v485 = vadd.f32 %v456, %v477
        %v486 = vadd.f32 %v457, %v478
        %v487 = vadd.f32 %v458, %v479
        %v488 = vadd.f32 %v459, %v480
        %v489 = vadd.f32 %v460, %v481
        %v490 = vld [vmem:[%s438 + $0x2] sm:$0xff]
        %v491 = vld [vmem:[%s438 + $0x12] sm:$0xff]
        %v492 = vld [vmem:[%s438 + $0x22] sm:$0xff]
        %v493 = vld [vmem:[%s438 + $0x32] sm:$0xff]
        %v494 = vld [vmem:[%s438 + $0x42] sm:$0xff]
        %v495 = vld [vmem:[%s438 + $0x52] sm:$0xff]
        %v496 = vld [vmem:[%s438 + $0x62] sm:$0xff]
        %v497 = vld [vmem:[%s438 + $0x72] sm:$0xff]
        %v498 = vld [vmem:[%s1 + $0x2] sm:$0x1]
        %v499 = vlaneseq
        %v500 = vshrl.u32 %v499, 7
        %v501 = vsub.s32 0, %v500
        %v502 = vrot.slane %v498, %v501
        %v503 = vmul.f32 %v490, %v502
        %v504 = vmul.f32 %v491, %v502
        %v505 = vmul.f32 %v492, %v502
        %v506 = vmul.f32 %v493, %v502
        %v507 = vmul.f32 %v494, %v502
        %v508 = vmul.f32 %v495, %v502
        %v509 = vmul.f32 %v496, %v502
        %v510 = vmul.f32 %v497, %v502
        %v511 = vadd.f32 %v482, %v503
        %v512 = vadd.f32 %v483, %v504
        %v513 = vadd.f32 %v484, %v505
        %v514 = vadd.f32 %v485, %v506
        %v515 = vadd.f32 %v486, %v507
        %v516 = vadd.f32 %v487, %v508
        %v517 = vadd.f32 %v488, %v509
        %v518 = vadd.f32 %v489, %v510
        %s519 = scalar_lea.vmem %s438, 16
        %v520 = vld [vmem:[%s519] sm:$0xff]
        %v521 = vld [vmem:[%s519 + $0x10] sm:$0xff]
        %v522 = vld [vmem:[%s519 + $0x20] sm:$0xff]
        %v523 = vld [vmem:[%s519 + $0x30] sm:$0xff]
        %v524 = vld [vmem:[%s519 + $0x40] sm:$0xff]
        %v525 = vld [vmem:[%s519 + $0x50] sm:$0xff]
        %v526 = vld [vmem:[%s519 + $0x60] sm:$0xff]
        %v527 = vld [vmem:[%s519 + $0x70] sm:$0xff]
        %v528 = vld [vmem:[%s1 + $0x3] sm:$0x1]
        %v529 = vlaneseq
        %v530 = vshrl.u32 %v529, 7
        %v531 = vsub.s32 0, %v530
        %v532 = vrot.slane %v528, %v531
        %v533 = vmul.f32 %v520, %v532
        %v534 = vmul.f32 %v521, %v532
        %v535 = vmul.f32 %v522, %v532
        %v536 = vmul.f32 %v523, %v532
        %v537 = vmul.f32 %v524, %v532
        %v538 = vmul.f32 %v525, %v532
        %v539 = vmul.f32 %v526, %v532
        %v540 = vmul.f32 %v527, %v532
        %v541 = vadd.f32 %v511, %v533
        %v542 = vadd.f32 %v512, %v534
        %v543 = vadd.f32 %v513, %v535
        %v544 = vadd.f32 %v514, %v536
        %v545 = vadd.f32 %v515, %v537
        %v546 = vadd.f32 %v516, %v538
        %v547 = vadd.f32 %v517, %v539
        %v548 = vadd.f32 %v518, %v540
        %v549 = vld [vmem:[%s519 + $0x1] sm:$0xff]
        %v550 = vld [vmem:[%s519 + $0x11] sm:$0xff]
        %v551 = vld [vmem:[%s519 + $0x21] sm:$0xff]
        %v552 = vld [vmem:[%s519 + $0x31] sm:$0xff]
        %v553 = vld [vmem:[%s519 + $0x41] sm:$0xff]
        %v554 = vld [vmem:[%s519 + $0x51] sm:$0xff]
        %v555 = vld [vmem:[%s519 + $0x61] sm:$0xff]
        %v556 = vld [vmem:[%s519 + $0x71] sm:$0xff]
        %v557 = vld [vmem:[%s1 + $0x4] sm:$0x1]
        %v558 = vlaneseq
        %v559 = vshrl.u32 %v558, 7
        %v560 = vsub.s32 0, %v559
        %v561 = vrot.slane %v557, %v560
        %v562 = vmul.f32 %v549, %v561
        %v563 = vmul.f32 %v550, %v561
        %v564 = vmul.f32 %v551, %v561
        %v565 = vmul.f32 %v552, %v561
        %v566 = vmul.f32 %v553, %v561
        %v567 = vmul.f32 %v554, %v561
        %v568 = vmul.f32 %v555, %v561
        %v569 = vmul.f32 %v556, %v561
        %v570 = vadd.f32 %v541, %v562
        %v571 = vadd.f32 %v542, %v563
        %v572 = vadd.f32 %v543, %v564
        %v573 = vadd.f32 %v544, %v565
        %v574 = vadd.f32 %v545, %v566
        %v575 = vadd.f32 %v546, %v567
        %v576 = vadd.f32 %v547, %v568
        %v577 = vadd.f32 %v548, %v569
        %v578 = vld [vmem:[%s519 + $0x2] sm:$0xff]
        %v579 = vld [vmem:[%s519 + $0x12] sm:$0xff]
        %v580 = vld [vmem:[%s519 + $0x22] sm:$0xff]
        %v581 = vld [vmem:[%s519 + $0x32] sm:$0xff]
        %v582 = vld [vmem:[%s519 + $0x42] sm:$0xff]
        %v583 = vld [vmem:[%s519 + $0x52] sm:$0xff]
        %v584 = vld [vmem:[%s519 + $0x62] sm:$0xff]
        %v585 = vld [vmem:[%s519 + $0x72] sm:$0xff]
        %v586 = vld [vmem:[%s1 + $0x5] sm:$0x1]
        %v587 = vlaneseq
        %v588 = vshrl.u32 %v587, 7
        %v589 = vsub.s32 0, %v588
        %v590 = vrot.slane %v586, %v589
        %v591 = vmul.f32 %v578, %v590
        %v592 = vmul.f32 %v579, %v590
        %v593 = vmul.f32 %v580, %v590
        %v594 = vmul.f32 %v581, %v590
        %v595 = vmul.f32 %v582, %v590
        %v596 = vmul.f32 %v583, %v590
        %v597 = vmul.f32 %v584, %v590
        %v598 = vmul.f32 %v585, %v590
        %v599 = vadd.f32 %v570, %v591
        %v600 = vadd.f32 %v571, %v592
        %v601 = vadd.f32 %v572, %v593
        %v602 = vadd.f32 %v573, %v594
        %v603 = vadd.f32 %v574, %v595
        %v604 = vadd.f32 %v575, %v596
        %v605 = vadd.f32 %v576, %v597
        %v606 = vadd.f32 %v577, %v598
        %s607 = scalar_lea.vmem %s438, 32
        %v608 = vld [vmem:[%s607] sm:$0xff]
        %v609 = vld [vmem:[%s607 + $0x10] sm:$0xff]
        %v610 = vld [vmem:[%s607 + $0x20] sm:$0xff]
        %v611 = vld [vmem:[%s607 + $0x30] sm:$0xff]
        %v612 = vld [vmem:[%s607 + $0x40] sm:$0xff]
        %v613 = vld [vmem:[%s607 + $0x50] sm:$0xff]
        %v614 = vld [vmem:[%s607 + $0x60] sm:$0xff]
        %v615 = vld [vmem:[%s607 + $0x70] sm:$0xff]
        %v616 = vld [vmem:[%s1 + $0x6] sm:$0x1]
        %v617 = vlaneseq
        %v618 = vshrl.u32 %v617, 7
        %v619 = vsub.s32 0, %v618
        %v620 = vrot.slane %v616, %v619
        %v621 = vmul.f32 %v608, %v620
        %v622 = vmul.f32 %v609, %v620
        %v623 = vmul.f32 %v610, %v620
        %v624 = vmul.f32 %v611, %v620
        %v625 = vmul.f32 %v612, %v620
        %v626 = vmul.f32 %v613, %v620
        %v627 = vmul.f32 %v614, %v620
        %v628 = vmul.f32 %v615, %v620
        %v629 = vadd.f32 %v599, %v621
        %v630 = vadd.f32 %v600, %v622
        %v631 = vadd.f32 %v601, %v623
        %v632 = vadd.f32 %v602, %v624
        %v633 = vadd.f32 %v603, %v625
        %v634 = vadd.f32 %v604, %v626
        %v635 = vadd.f32 %v605, %v627
        %v636 = vadd.f32 %v606, %v628
        %v637 = vld [vmem:[%s607 + $0x1] sm:$0xff]
        %v638 = vld [vmem:[%s607 + $0x11] sm:$0xff]
        %v639 = vld [vmem:[%s607 + $0x21] sm:$0xff]
        %v640 = vld [vmem:[%s607 + $0x31] sm:$0xff]
        %v641 = vld [vmem:[%s607 + $0x41] sm:$0xff]
        %v642 = vld [vmem:[%s607 + $0x51] sm:$0xff]
        %v643 = vld [vmem:[%s607 + $0x61] sm:$0xff]
        %v644 = vld [vmem:[%s607 + $0x71] sm:$0xff]
        %v645 = vld [vmem:[%s1 + $0x7] sm:$0x1]
        %v646 = vlaneseq
        %v647 = vshrl.u32 %v646, 7
        %v648 = vsub.s32 0, %v647
        %v649 = vrot.slane %v645, %v648
        %v650 = vmul.f32 %v637, %v649
        %v651 = vmul.f32 %v638, %v649
        %v652 = vmul.f32 %v639, %v649
        %v653 = vmul.f32 %v640, %v649
        %v654 = vmul.f32 %v641, %v649
        %v655 = vmul.f32 %v642, %v649
        %v656 = vmul.f32 %v643, %v649
        %v657 = vmul.f32 %v644, %v649
        %v658 = vadd.f32 %v629, %v650
        %v659 = vadd.f32 %v630, %v651
        %v660 = vadd.f32 %v631, %v652
        %v661 = vadd.f32 %v632, %v653
        %v662 = vadd.f32 %v633, %v654
        %v663 = vadd.f32 %v634, %v655
        %v664 = vadd.f32 %v635, %v656
        %v665 = vadd.f32 %v636, %v657
        %v666 = vld [vmem:[%s607 + $0x2] sm:$0xff]
        %v667 = vld [vmem:[%s607 + $0x12] sm:$0xff]
        %v668 = vld [vmem:[%s607 + $0x22] sm:$0xff]
        %v669 = vld [vmem:[%s607 + $0x32] sm:$0xff]
        %v670 = vld [vmem:[%s607 + $0x42] sm:$0xff]
        %v671 = vld [vmem:[%s607 + $0x52] sm:$0xff]
        %v672 = vld [vmem:[%s607 + $0x62] sm:$0xff]
        %v673 = vld [vmem:[%s607 + $0x72] sm:$0xff]
        %v674 = vld [vmem:[%s1 + $0x8] sm:$0x1]
        %v675 = vlaneseq
        %v676 = vshrl.u32 %v675, 7
        %v677 = vsub.s32 0, %v676
        %v678 = vrot.slane %v674, %v677
        %v679 = vmul.f32 %v666, %v678
        %v680 = vmul.f32 %v667, %v678
        %v681 = vmul.f32 %v668, %v678
        %v682 = vmul.f32 %v669, %v678
        %v683 = vmul.f32 %v670, %v678
        %v684 = vmul.f32 %v671, %v678
        %v685 = vmul.f32 %v672, %v678
        %v686 = vmul.f32 %v673, %v678
        %v687 = vadd.f32 %v658, %v679
        %v688 = vadd.f32 %v659, %v680
        %v689 = vadd.f32 %v660, %v681
        %v690 = vadd.f32 %v661, %v682
        %v691 = vadd.f32 %v662, %v683
        %v692 = vadd.f32 %v663, %v684
        %v693 = vadd.f32 %v664, %v685
        %v694 = vadd.f32 %v665, %v686
        %v695 = vld [vmem:[%s2] sm:$0x1]
        %v697 = vlaneseq
        %v698 = vshrl.u32 %v697, 7
        %v699 = vsub.s32 0, %v698
        %v700 = vrot.slane %v695, %v699
        %v702 = vadd.f32 %v687, %v700
        %v703 = vadd.f32 %v688, %v700
        %v704 = vadd.f32 %v689, %v700
        %v705 = vadd.f32 %v690, %v700
        %v706 = vadd.f32 %v691, %v700
        %v707 = vadd.f32 %v692, %v700
        %v708 = vadd.f32 %v693, %v700
        %v709 = vadd.f32 %v694, %v700
        %vm710 = vcmask 261120
        %v711 = vsel %vm710, %v702, 0.0
        %v712 = vsel %vm710, %v703, 0.0
        %v713 = vadd.f32 %v711, %v712
        %v714 = vsel %vm710, %v704, 0.0
        %v715 = vadd.f32 %v713, %v714
        %v716 = vsel %vm710, %v705, 0.0
        %v717 = vadd.f32 %v715, %v716
        %v718 = vsel %vm710, %v706, 0.0
        %v719 = vadd.f32 %v717, %v718
        %v720 = vsel %vm710, %v707, 0.0
        %v721 = vadd.f32 %v719, %v720
        %v722 = vsel %vm710, %v708, 0.0
        %v723 = vadd.f32 %v721, %v722
        %v724 = vsel %vm710, %v709, 0.0
        %v725 = vadd.f32 %v723, %v724
        %v726 = vsel %vm710, %v725, 0.0
        %v727 = vrot.slane %v726, 4
        %v728 = vadd.f32 %v726, %v727
        %v729 = vrot.slane %v728, 2
        %v730 = vadd.f32 %v728, %v729
        %v731 = vrot.slane %v730, 1
        %v732 = vadd.f32 %v730, %v731
        %v733 = vmul.f32 %v732, 0.015625
        %v734 = vld [vmem:[%s5] sm:$0xff]
        %v735 = vld [vmem:[%s5 + $0x8] sm:$0xff]
        %v736 = vld [vmem:[%s5 + $0x10] sm:$0xff]
        %v737 = vld [vmem:[%s5 + $0x18] sm:$0xff]
        %v738 = vld [vmem:[%s6] sm:$0x1]
        %v740 = vsel %vm710, %v733, 0
        %742 = vmatprep.subr.mxu0 0.0
        %743 = vmatpush1.msra.mxu0 0.0
        %744 = vmatprep.subr.mxu0 0.0
        %745 = vmatpush1.msra.mxu0 0.0
        %746 = vmatprep.subr.mxu0 0.0
        %747 = vmatpush1.msra.mxu0 0.0
        %748 = vmatprep.subr.mxu0 0.0
        %749 = vmatpush1.msra.mxu0 0.0
        %750 = vmatprep.subr.mxu0 0.0
        %751 = vmatpush1.msra.mxu0 0.0
        %752 = vmatprep.subr.mxu0 0.0
        %753 = vmatpush1.msra.mxu0 0.0
        %754 = vmatprep.subr.mxu0 0.0
        %755 = vmatpush1.msra.mxu0 0.0
        %756 = vmatprep.subr.mxu0 0.0
        %757 = vmatpush1.msra.mxu0 0.0
        %758 = vmatprep.subr.mxu0 0.0
        %759 = vmatpush1.msra.mxu0 0.0
        %760 = vmatprep.subr.mxu0 0.0
        %761 = vmatpush1.msra.mxu0 0.0
        %762 = vmatprep.subr.mxu0 0.0
        %763 = vmatpush1.msra.mxu0 0.0
        %764 = vmatprep.subr.mxu0 0.0
        %765 = vmatpush1.msra.mxu0 0.0
        %766 = vmatprep.subr.mxu0 0.0
        %767 = vmatpush1.msra.mxu0 %v737
        %768 = vmatprep.subr.mxu0 0.0
        %769 = vmatpush1.msra.mxu0 %v736
        %770 = vmatprep.subr.mxu0 0.0
        %771 = vmatpush1.msra.mxu0 %v735
        %772 = vmatprep.subr.mxu0 0.0
        %773 = vmatpush1.msra.mxu0 %v734
        %774 = vmatprep.subr.mxu0 0.0
        %775 = vmatpush2.msra.mxu0 0.0
        %776 = vmatprep.subr.mxu0 0.0
        %777 = vmatpush2.msra.mxu0 0.0
        %778 = vmatprep.subr.mxu0 0.0
        %779 = vmatpush2.msra.mxu0 0.0
        %780 = vmatprep.subr.mxu0 0.0
        %781 = vmatpush2.msra.mxu0 0.0
        %782 = vmatprep.subr.mxu0 0.0
        %783 = vmatpush2.msra.mxu0 0.0
        %784 = vmatprep.subr.mxu0 0.0
        %785 = vmatpush2.msra.mxu0 0.0
        %786 = vmatprep.subr.mxu0 0.0
        %787 = vmatpush2.msra.mxu0 0.0
        %788 = vmatprep.subr.mxu0 0.0
        %789 = vmatpush2.msra.mxu0 0.0
        %790 = vmatprep.subr.mxu0 0.0
        %791 = vmatpush2.msra.mxu0 0.0
        %792 = vmatprep.subr.mxu0 0.0
        %793 = vmatpush2.msra.mxu0 0.0
        %794 = vmatprep.subr.mxu0 0.0
        %795 = vmatpush2.msra.mxu0 0.0
        %796 = vmatprep.subr.mxu0 0.0
        %797 = vmatpush2.msra.mxu0 0.0
        %798 = vmatprep.subr.mxu0 0.0
        %799 = vmatpush2.msra.mxu0 0.0
        %800 = vmatprep.subr.mxu0 0.0
        %801 = vmatpush2.msra.mxu0 0.0
        %802 = vmatprep.subr.mxu0 0.0
        %803 = vmatpush2.msra.mxu0 0.0
        %804 = vmatprep.subr.mxu0 0.0
        %805 = vmatpush2.msra.mxu0 0.0
        %806 = vmatprep.mubr.f32.mxu0 0.0
        %807 = vmatmul.mubr.f32.gmra.mxu0 %v740
        %v808 = vpop.f32.mrf.mxu0
        %v809 = vadd.f32 %v738, %v808
        %v810 = vpop.f32.mrf.mxu0
        %811 = vdwg.mxu0
        %v812 = vmax.f32 %v809, 0.0
        %v813 = vld [vmem:[%s7] sm:$0x3]
        %v814 = vld [vmem:[%s8] sm:$0x1]
        %vm815 = vcmask 15360
        %v817 = vsel %vm815, %v812, 0
        %vm819 = vcmask 1041408
        %v821 = vsel %vm819, %v813, 0
        %823 = vmatprep.subr.mxu0 0.0
        %824 = vmatpush1.msra.mxu0 0.0
        %825 = vmatprep.subr.mxu0 0.0
        %826 = vmatpush1.msra.mxu0 0.0
        %827 = vmatprep.subr.mxu0 0.0
        %828 = vmatpush1.msra.mxu0 0.0
        %829 = vmatprep.subr.mxu0 0.0
        %830 = vmatpush1.msra.mxu0 0.0
        %831 = vmatprep.subr.mxu0 0.0
        %832 = vmatpush1.msra.mxu0 0.0
        %833 = vmatprep.subr.mxu0 0.0
        %834 = vmatpush1.msra.mxu0 0.0
        %835 = vmatprep.subr.mxu0 0.0
        %836 = vmatpush1.msra.mxu0 0.0
        %837 = vmatprep.subr.mxu0 0.0
        %838 = vmatpush1.msra.mxu0 0.0
        %839 = vmatprep.subr.mxu0 0.0
        %840 = vmatpush1.msra.mxu0 0.0
        %841 = vmatprep.subr.mxu0 0.0
        %842 = vmatpush1.msra.mxu0 0.0
        %843 = vmatprep.subr.mxu0 0.0
        %844 = vmatpush1.msra.mxu0 0.0
        %845 = vmatprep.subr.mxu0 0.0
        %846 = vmatpush1.msra.mxu0 0.0
        %847 = vmatprep.subr.mxu0 0.0
        %848 = vmatpush1.msra.mxu0 0.0
        %849 = vmatprep.subr.mxu0 0.0
        %850 = vmatpush1.msra.mxu0 0.0
        %851 = vmatprep.subr.mxu0 0.0
        %852 = vmatpush1.msra.mxu0 0.0
        %853 = vmatprep.subr.mxu0 0.0
        %854 = vmatpush1.msra.mxu0 %v821
        %855 = vmatprep.subr.mxu0 0.0
        %856 = vmatpush2.msra.mxu0 0.0
        %857 = vmatprep.subr.mxu0 0.0
        %858 = vmatpush2.msra.mxu0 0.0
        %859 = vmatprep.subr.mxu0 0.0
        %860 = vmatpush2.msra.mxu0 0.0
        %861 = vmatprep.subr.mxu0 0.0
        %862 = vmatpush2.msra.mxu0 0.0
        %863 = vmatprep.subr.mxu0 0.0
        %864 = vmatpush2.msra.mxu0 0.0
        %865 = vmatprep.subr.mxu0 0.0
        %866 = vmatpush2.msra.mxu0 0.0
        %867 = vmatprep.subr.mxu0 0.0
        %868 = vmatpush2.msra.mxu0 0.0
        %869 = vmatprep.subr.mxu0 0.0
        %870 = vmatpush2.msra.mxu0 0.0
        %871 = vmatprep.subr.mxu0 0.0
        %872 = vmatpush2.msra.mxu0 0.0
        %873 = vmatprep.subr.mxu0 0.0
        %874 = vmatpush2.msra.mxu0 0.0
        %875 = vmatprep.subr.mxu0 0.0
        %876 = vmatpush2.msra.mxu0 0.0
        %877 = vmatprep.subr.mxu0 0.0
        %878 = vmatpush2.msra.mxu0 0.0
        %879 = vmatprep.subr.mxu0 0.0
        %880 = vmatpush2.msra.mxu0 0.0
        %881 = vmatprep.subr.mxu0 0.0
        %882 = vmatpush2.msra.mxu0 0.0
        %883 = vmatprep.subr.mxu0 0.0
        %884 = vmatpush2.msra.mxu0 0.0
        %885 = vmatprep.subr.mxu0 0.0
        %886 = vmatpush2.msra.mxu0 0.0
        %887 = vmatprep.mubr.f32.mxu0 0.0
        %888 = vmatmul.mubr.f32.gmra.mxu0 %v817
        %v889 = vpop.f32.mrf.mxu0
        %v890 = vadd.f32 %v814, %v889
        %v891 = vpop.f32.mrf.mxu0
        %892 = vdwg.mxu0
        %v893 = vsub.f32 0.0, %v890
        %v894 = vmul.f32 %v893, 1.442695
        %v895 = vpow.pop %v894
        %v896 = vadd.f32 %v895, 1.0
        %v897 = vrcp.pop %v896
        %v898 = vmul.f32 1.0, %v897
        %v899 = vlaneseq
        %v900 = vshrl.u32 %v899, 7
        %v901 = vsub.s32 0, %v900
        %v902 = vrot.slane %v898, %v901
        %v903 = vmul.f32 %v702, %v902
        %v904 = vmul.f32 %v703, %v902
        %v905 = vmul.f32 %v704, %v902
        %v906 = vmul.f32 %v705, %v902
        %v907 = vmul.f32 %v706, %v902
        %v908 = vmul.f32 %v707, %v902
        %v909 = vmul.f32 %v708, %v902
        %v910 = vmul.f32 %v709, %v902
        %v911 = vmax.f32 %v903, 0.0
        %v912 = vmax.f32 %v904, 0.0
        %v913 = vmax.f32 %v905, 0.0
        %v914 = vmax.f32 %v906, 0.0
        %v915 = vmax.f32 %v907, 0.0
        %v916 = vmax.f32 %v908, 0.0
        %v917 = vmax.f32 %v909, 0.0
        %v918 = vmax.f32 %v910, 0.0
        %v919 = vpack.c.bf16 %v912, %v911
        %v920 = vpack.c.bf16 %v914, %v913
        %v921 = vpack.c.bf16 %v916, %v915
        %v922 = vpack.c.bf16 %v918, %v917
        %v923 = vld [vmem:[%s3] sm:$0xf]
        %v924 = vld [vmem:[%s3 + $0x4] sm:$0xf]
        %v925 = vld [vmem:[%s3 + $0x8] sm:$0xf]
        %v926 = vld [vmem:[%s3 + $0xc] sm:$0xf]
        %v927 = vld [vmem:[%s4] sm:$0x1]
        %v929 = vlaneseq
        %v930 = vshrl.u32 %v929, 7
        %v931 = vsub.s32 0, %v930
        %v932 = vrot.slane %v927, %v931
        %v938 = vunpack.c.l.b16 %v923
        %v939 = vunpack.c.l.b16 %v924
        %v940 = vunpack.c.l.b16 %v925
        %v941 = vunpack.c.l.b16 %v926
        %v942 = vpack.c.b16 %v939, %v938
        %v943 = vpack.c.b16 %v941, %v940
        %v947 = vsel %vm710, %v919, 0
        %v950 = vsel %vm710, %v920, 0
        %v953 = vsel %vm710, %v921, 0
        %v956 = vsel %vm710, %v922, 0
        %958 = vmatprep.subr.bf16.mxu0 0
        %959 = vmatpush1.bf16.msra.mxu0 0
        %960 = vmatprep.subr.bf16.mxu0 0
        %961 = vmatpush1.bf16.msra.mxu0 0
        %962 = vmatprep.subr.bf16.mxu0 0
        %963 = vmatpush1.bf16.msra.mxu0 0
        %964 = vmatprep.subr.bf16.mxu0 0
        %965 = vmatpush1.bf16.msra.mxu0 0
        %966 = vmatprep.subr.bf16.mxu0 0
        %967 = vmatpush1.bf16.msra.mxu0 0
        %968 = vmatprep.subr.bf16.mxu0 0
        %969 = vmatpush1.bf16.msra.mxu0 0
        %970 = vmatprep.subr.bf16.mxu0 0
        %971 = vmatpush1.bf16.msra.mxu0 %v943
        %972 = vmatprep.subr.bf16.mxu0 0
        %973 = vmatpush1.bf16.msra.mxu0 %v942
        %974 = vmatprep.subr.bf16.mxu0 0
        %975 = vmatpush2.bf16.msra.mxu0 0
        %976 = vmatprep.subr.bf16.mxu0 0
        %977 = vmatpush2.bf16.msra.mxu0 0
        %978 = vmatprep.subr.bf16.mxu0 0
        %979 = vmatpush2.bf16.msra.mxu0 0
        %980 = vmatprep.subr.bf16.mxu0 0
        %981 = vmatpush2.bf16.msra.mxu0 0
        %982 = vmatprep.subr.bf16.mxu0 0
        %983 = vmatpush2.bf16.msra.mxu0 0
        %984 = vmatprep.subr.bf16.mxu0 0
        %985 = vmatpush2.bf16.msra.mxu0 0
        %986 = vmatprep.subr.bf16.mxu0 0
        %987 = vmatpush2.bf16.msra.mxu0 0
        %988 = vmatprep.subr.bf16.mxu0 0
        %989 = vmatpush2.bf16.msra.mxu0 0
        %990 = vmatprep.mubr.bf16.mxu0 0
        %991 = vmatmul.mubr.bf16.gmra.mxu0 %v947
        %v992 = vpop.f32.mrf.mxu0
        %v993 = vadd.f32 %v932, %v992
        %v994 = vpop.f32.mrf.mxu0
        %v995 = vpop.f32.mrf.mxu0
        %v996 = vadd.f32 %v932, %v995
        %v997 = vpop.f32.mrf.mxu0
        %998 = vmatprep.mubr.bf16.mxu0 0
        %999 = vmatmul.mubr.bf16.gmra.mxu0 %v950
        %v1000 = vpop.f32.mrf.mxu0
        %v1001 = vadd.f32 %v932, %v1000
        %v1002 = vpop.f32.mrf.mxu0
        %v1003 = vpop.f32.mrf.mxu0
        %v1004 = vadd.f32 %v932, %v1003
        %v1005 = vpop.f32.mrf.mxu0
        %1006 = vmatprep.mubr.bf16.mxu0 0
        %1007 = vmatmul.mubr.bf16.gmra.mxu0 %v953
        %v1008 = vpop.f32.mrf.mxu0
        %v1009 = vadd.f32 %v932, %v1008
        %v1010 = vpop.f32.mrf.mxu0
        %v1011 = vpop.f32.mrf.mxu0
        %v1012 = vadd.f32 %v932, %v1011
        %v1013 = vpop.f32.mrf.mxu0
        %1014 = vmatprep.mubr.bf16.mxu0 0
        %1015 = vmatmul.mubr.bf16.gmra.mxu0 %v956
        %v1016 = vpop.f32.mrf.mxu0
        %v1017 = vadd.f32 %v932, %v1016
        %v1018 = vpop.f32.mrf.mxu0
        %v1019 = vpop.f32.mrf.mxu0
        %v1020 = vadd.f32 %v932, %v1019
        %v1021 = vpop.f32.mrf.mxu0
        %1022 = vdwg.mxu0
        %v1023 = vsel %vm710, %v993, 0.0
        %v1024 = vsel %vm710, %v996, 0.0
        %v1025 = vadd.f32 %v1023, %v1024
        %v1026 = vsel %vm710, %v1001, 0.0
        %v1027 = vadd.f32 %v1025, %v1026
        %v1028 = vsel %vm710, %v1004, 0.0
        %v1029 = vadd.f32 %v1027, %v1028
        %v1030 = vsel %vm710, %v1009, 0.0
        %v1031 = vadd.f32 %v1029, %v1030
        %v1032 = vsel %vm710, %v1012, 0.0
        %v1033 = vadd.f32 %v1031, %v1032
        %v1034 = vsel %vm710, %v1017, 0.0
        %v1035 = vadd.f32 %v1033, %v1034
        %v1036 = vsel %vm710, %v1020, 0.0
        %v1037 = vadd.f32 %v1035, %v1036
        %v1038 = vrot.slane %v1037, 4
        %v1039 = vadd.f32 %v1037, %v1038
        %v1040 = vrot.slane %v1039, 2
        %v1041 = vadd.f32 %v1039, %v1040
        %v1042 = vrot.slane %v1041, 1
        %v1043 = vadd.f32 %v1041, %v1042
        %v1044 = vmul.f32 %v1043, 0.015625
        %v1045 = vld [vmem:[%s9] sm:$0xff]
        %v1046 = vld [vmem:[%s9 + $0x8] sm:$0xff]
        %v1047 = vld [vmem:[%s9 + $0x10] sm:$0xff]
        %v1048 = vld [vmem:[%s9 + $0x18] sm:$0xff]
        %v1049 = vld [vmem:[%s10] sm:$0x1]
        %v1051 = vsel %vm710, %v1044, 0
        %1053 = vmatprep.subr.mxu0 0.0
        %1054 = vmatpush1.msra.mxu0 0.0
        %1055 = vmatprep.subr.mxu0 0.0
        %1056 = vmatpush1.msra.mxu0 0.0
        %1057 = vmatprep.subr.mxu0 0.0
        %1058 = vmatpush1.msra.mxu0 0.0
        %1059 = vmatprep.subr.mxu0 0.0
        %1060 = vmatpush1.msra.mxu0 0.0
        %1061 = vmatprep.subr.mxu0 0.0
        %1062 = vmatpush1.msra.mxu0 0.0
        %1063 = vmatprep.subr.mxu0 0.0
        %1064 = vmatpush1.msra.mxu0 0.0
        %1065 = vmatprep.subr.mxu0 0.0
        %1066 = vmatpush1.msra.mxu0 0.0
        %1067 = vmatprep.subr.mxu0 0.0
        %1068 = vmatpush1.msra.mxu0 0.0
        %1069 = vmatprep.subr.mxu0 0.0
        %1070 = vmatpush1.msra.mxu0 0.0
        %1071 = vmatprep.subr.mxu0 0.0
        %1072 = vmatpush1.msra.mxu0 0.0
        %1073 = vmatprep.subr.mxu0 0.0
        %1074 = vmatpush1.msra.mxu0 0.0
        %1075 = vmatprep.subr.mxu0 0.0
        %1076 = vmatpush1.msra.mxu0 0.0
        %1077 = vmatprep.subr.mxu0 0.0
        %1078 = vmatpush1.msra.mxu0 %v1048
        %1079 = vmatprep.subr.mxu0 0.0
        %1080 = vmatpush1.msra.mxu0 %v1047
        %1081 = vmatprep.subr.mxu0 0.0
        %1082 = vmatpush1.msra.mxu0 %v1046
        %1083 = vmatprep.subr.mxu0 0.0
        %1084 = vmatpush1.msra.mxu0 %v1045
        %1085 = vmatprep.subr.mxu0 0.0
        %1086 = vmatpush2.msra.mxu0 0.0
        %1087 = vmatprep.subr.mxu0 0.0
        %1088 = vmatpush2.msra.mxu0 0.0
        %1089 = vmatprep.subr.mxu0 0.0
        %1090 = vmatpush2.msra.mxu0 0.0
        %1091 = vmatprep.subr.mxu0 0.0
        %1092 = vmatpush2.msra.mxu0 0.0
        %1093 = vmatprep.subr.mxu0 0.0
        %1094 = vmatpush2.msra.mxu0 0.0
        %1095 = vmatprep.subr.mxu0 0.0
        %1096 = vmatpush2.msra.mxu0 0.0
        %1097 = vmatprep.subr.mxu0 0.0
        %1098 = vmatpush2.msra.mxu0 0.0
        %1099 = vmatprep.subr.mxu0 0.0
        %1100 = vmatpush2.msra.mxu0 0.0
        %1101 = vmatprep.subr.mxu0 0.0
        %1102 = vmatpush2.msra.mxu0 0.0
        %1103 = vmatprep.subr.mxu0 0.0
        %1104 = vmatpush2.msra.mxu0 0.0
        %1105 = vmatprep.subr.mxu0 0.0
        %1106 = vmatpush2.msra.mxu0 0.0
        %1107 = vmatprep.subr.mxu0 0.0
        %1108 = vmatpush2.msra.mxu0 0.0
        %1109 = vmatprep.subr.mxu0 0.0
        %1110 = vmatpush2.msra.mxu0 0.0
        %1111 = vmatprep.subr.mxu0 0.0
        %1112 = vmatpush2.msra.mxu0 0.0
        %1113 = vmatprep.subr.mxu0 0.0
        %1114 = vmatpush2.msra.mxu0 0.0
        %1115 = vmatprep.subr.mxu0 0.0
        %1116 = vmatpush2.msra.mxu0 0.0
        %1117 = vmatprep.mubr.f32.mxu0 0.0
        %1118 = vmatmul.mubr.f32.gmra.mxu0 %v1051
        %v1119 = vpop.f32.mrf.mxu0
        %v1120 = vadd.f32 %v1049, %v1119
        %v1121 = vpop.f32.mrf.mxu0
        %1122 = vdwg.mxu0
        %v1123 = vmax.f32 %v1120, 0.0
        %v1124 = vld [vmem:[%s11] sm:$0x3]
        %v1125 = vld [vmem:[%s12] sm:$0x1]
        %v1127 = vsel %vm815, %v1123, 0
        %v1130 = vsel %vm819, %v1124, 0
        %1132 = vmatprep.subr.mxu0 0.0
        %1133 = vmatpush1.msra.mxu0 0.0
        %1134 = vmatprep.subr.mxu0 0.0
        %1135 = vmatpush1.msra.mxu0 0.0
        %1136 = vmatprep.subr.mxu0 0.0
        %1137 = vmatpush1.msra.mxu0 0.0
        %1138 = vmatprep.subr.mxu0 0.0
        %1139 = vmatpush1.msra.mxu0 0.0
        %1140 = vmatprep.subr.mxu0 0.0
        %1141 = vmatpush1.msra.mxu0 0.0
        %1142 = vmatprep.subr.mxu0 0.0
        %1143 = vmatpush1.msra.mxu0 0.0
        %1144 = vmatprep.subr.mxu0 0.0
        %1145 = vmatpush1.msra.mxu0 0.0
        %1146 = vmatprep.subr.mxu0 0.0
        %1147 = vmatpush1.msra.mxu0 0.0
        %1148 = vmatprep.subr.mxu0 0.0
        %1149 = vmatpush1.msra.mxu0 0.0
        %1150 = vmatprep.subr.mxu0 0.0
        %1151 = vmatpush1.msra.mxu0 0.0
        %1152 = vmatprep.subr.mxu0 0.0
        %1153 = vmatpush1.msra.mxu0 0.0
        %1154 = vmatprep.subr.mxu0 0.0
        %1155 = vmatpush1.msra.mxu0 0.0
        %1156 = vmatprep.subr.mxu0 0.0
        %1157 = vmatpush1.msra.mxu0 0.0
        %1158 = vmatprep.subr.mxu0 0.0
        %1159 = vmatpush1.msra.mxu0 0.0
        %1160 = vmatprep.subr.mxu0 0.0
        %1161 = vmatpush1.msra.mxu0 0.0
        %1162 = vmatprep.subr.mxu0 0.0
        %1163 = vmatpush1.msra.mxu0 %v1130
        %1164 = vmatprep.subr.mxu0 0.0
        %1165 = vmatpush2.msra.mxu0 0.0
        %1166 = vmatprep.subr.mxu0 0.0
        %1167 = vmatpush2.msra.mxu0 0.0
        %1168 = vmatprep.subr.mxu0 0.0
        %1169 = vmatpush2.msra.mxu0 0.0
        %1170 = vmatprep.subr.mxu0 0.0
        %1171 = vmatpush2.msra.mxu0 0.0
        %1172 = vmatprep.subr.mxu0 0.0
        %1173 = vmatpush2.msra.mxu0 0.0
        %1174 = vmatprep.subr.mxu0 0.0
        %1175 = vmatpush2.msra.mxu0 0.0
        %1176 = vmatprep.subr.mxu0 0.0
        %1177 = vmatpush2.msra.mxu0 0.0
        %1178 = vmatprep.subr.mxu0 0.0
        %1179 = vmatpush2.msra.mxu0 0.0
        %1180 = vmatprep.subr.mxu0 0.0
        %1181 = vmatpush2.msra.mxu0 0.0
        %1182 = vmatprep.subr.mxu0 0.0
        %1183 = vmatpush2.msra.mxu0 0.0
        %1184 = vmatprep.subr.mxu0 0.0
        %1185 = vmatpush2.msra.mxu0 0.0
        %1186 = vmatprep.subr.mxu0 0.0
        %1187 = vmatpush2.msra.mxu0 0.0
        %1188 = vmatprep.subr.mxu0 0.0
        %1189 = vmatpush2.msra.mxu0 0.0
        %1190 = vmatprep.subr.mxu0 0.0
        %1191 = vmatpush2.msra.mxu0 0.0
        %1192 = vmatprep.subr.mxu0 0.0
        %1193 = vmatpush2.msra.mxu0 0.0
        %1194 = vmatprep.subr.mxu0 0.0
        %1195 = vmatpush2.msra.mxu0 0.0
        %1196 = vmatprep.mubr.f32.mxu0 0.0
        %1197 = vmatmul.mubr.f32.gmra.mxu0 %v1127
        %v1198 = vpop.f32.mrf.mxu0
        %v1199 = vadd.f32 %v1125, %v1198
        %v1200 = vpop.f32.mrf.mxu0
        %1201 = vdwg.mxu0
        %v1202 = vsub.f32 0.0, %v1199
        %v1203 = vmul.f32 %v1202, 1.442695
        %v1204 = vpow.pop %v1203
        %v1205 = vadd.f32 %v1204, 1.0
        %v1206 = vrcp.pop %v1205
        %v1207 = vmul.f32 1.0, %v1206
        %v1208 = vlaneseq
        %v1209 = vshrl.u32 %v1208, 7
        %v1210 = vsub.s32 0, %v1209
        %v1211 = vrot.slane %v1207, %v1210
        %v1212 = vmul.f32 %v993, %v1211
        %v1213 = vmul.f32 %v996, %v1211
        %v1214 = vmul.f32 %v1001, %v1211
        %v1215 = vmul.f32 %v1004, %v1211
        %v1216 = vmul.f32 %v1009, %v1211
        %v1217 = vmul.f32 %v1012, %v1211
        %v1218 = vmul.f32 %v1017, %v1211
        %v1219 = vmul.f32 %v1020, %v1211
        %v1220 = vmax.f32 %v1212, 0.0
        %v1221 = vmax.f32 %v1213, 0.0
        %v1222 = vmax.f32 %v1214, 0.0
        %v1223 = vmax.f32 %v1215, 0.0
        %v1224 = vmax.f32 %v1216, 0.0
        %v1225 = vmax.f32 %v1217, 0.0
        %v1226 = vmax.f32 %v1218, 0.0
        %v1227 = vmax.f32 %v1219, 0.0
        %1228 = vst.msk [vmem:[%s433] sm:$0xff] %vm710, %v1220
        %1229 = vst.msk [vmem:[%s433 + $0x8] sm:$0xff] %vm710, %v1221
        %1230 = vst.msk [vmem:[%s433 + $0x10] sm:$0xff] %vm710, %v1222
        %1231 = vst.msk [vmem:[%s433 + $0x18] sm:$0xff] %vm710, %v1223
        %1232 = vst.msk [vmem:[%s433 + $0x20] sm:$0xff] %vm710, %v1224
        %1233 = vst.msk [vmem:[%s433 + $0x28] sm:$0xff] %vm710, %v1225
        %1234 = vst.msk [vmem:[%s433 + $0x30] sm:$0xff] %vm710, %v1226
        %1235 = vst.msk [vmem:[%s433 + $0x38] sm:$0xff] %vm710, %v1227
        %s1236 = sand.u32 %s313, 1
        %s1237 = scalar_lea.sflag [#allocation3], %s1236
        %s1238 = sand.u32 %s313, 1
        %s1239 = smul.addr %s1238, 64
        %s1240 = scalar_lea.vmem [#allocation2], %s1239
        // Predicated region
        $region73: #{_lambda_.3} parent=71 // pred_check
          %p1241 = pneg %p323
        $region74: #{_lambda_.3} parent=71 // pred_check_branch
          %1243 = sbr.rel (%p1241) target = $region76
        $region75: #{_lambda_.3} parent=71 // pred_region
          %s1245 = ssub.s32 1024, 1024
          %1246 = vsyncadd %s1237, %s1245
          %s1247 = smul.addr %s27, 8
          %s1248 = smul.addr %s1247, 128
          %s1249 = scalar_lea.hbm %s13, %s1248
          %s1250 = sshll.u32 %s1240, 4
          %s1251 = int_to_ptr.vmem [resolvable:$true] %s1250
          %1256 = dma.vmem_to_hbm [thread:$0]  %s1251, 1024, %s1249, %s1237, 128, 128, 8
        $region76: #{_lambda_.3} parent=71 // pred_fallthru
          _
      $region72: #{_lambda_.3} parent=5 // pred_fallthru
        _
      %p1257 = scmp.le.s32.totalorder 2, %s22
      // Predicated region
      $region77: #{_lambda_.3} parent=5 // pred_check
        %p1258 = pneg %p1257
      $region78: #{_lambda_.3} parent=5 // pred_check_branch
        %1260 = sbr.rel (%p1258) target = $region80
      $region79: #{_lambda_.3} parent=5 // pred_region
        %s1261 = ssub.s32 %s22, 2
        // Predicated region
        $region81: #{_lambda_.3} parent=79 // pred_check
          %p1262 = pneg %p329
        $region82: #{_lambda_.3} parent=79 // pred_check_branch
          %1264 = sbr.rel (%p1262) target = $region84
        $region83: #{_lambda_.3} parent=79 // pred_region
          %s1265 = sand.u32 %s314, 1
          %s1266 = scalar_lea.sflag [#allocation3], %s1265
          %s1267 = sand.u32 %s314, 1
          %s1268 = smul.addr %s1267, 64
          %s1269 = scalar_lea.vmem [#allocation2], %s1268
          %1270 = dma.done %s1266, 1024
        $region84: #{_lambda_.3} parent=79 // pred_fallthru
          _
      $region80: #{_lambda_.3} parent=5 // pred_fallthru
        _
    $region6: #{_lambda_.3} parent=1 // loop_footer
      %s26 = sadd.s32 1, %s22
    $region7: #{_lambda_.3} parent=1 // loop_footer_branch
      %21 = sbr.rel target = $region3
    $region8: #{_lambda_.3} parent=1 // loop_exit
      _
    %1271 = vsyncpa [#allocation3], 1
    %s1272 = scalar_lea.sflag [#allocation3], 1
    %1273 = vsyncpa %s1272, 1

</llo_original>
